<compile_context>
chip_gen: v7x
topology: tpu7x:2x2x1
jax: 0.10.0
libtpu: 0.0.40
codegen_flags: <defaults>
</compile_context>

<pallas_src>
import math

import jax
import jax.numpy as jnp
import numpy as np
from jax.experimental import pallas as pl
from jax.experimental.pallas import tpu as pltpu

EPS = 1e-5   # BatchNorm1d default eps
K = 5        # conv1 / conv2 kernel size

# Set to jnp.bfloat16 to feed bf16 operands to the MXU on v6e/v7x (accumulation
# stays f32).  Left at f32 by default so the 1e-3 check against the f32
# reference is comfortably met.
MATMUL_DTYPE = jnp.float32


def _cnn_kernel(x_ref, w1_ref, b1_ref, w2_ref, b2_ref, wh_ref, bh_ref, out_ref):
    B, L, Cin = x_ref.shape
    Chid = w1_ref.shape[1]
    n_heads = wh_ref.shape[1]          # n_out predict columns + 1 attention column
    n_out = n_heads - 1
    L1 = L - K + 1                     # after conv1 (valid, stride 1); even (asserted in wrapper)
    L2 = L1 // 2                       # after maxpool(kernel=2, stride=2)
    L3 = L2 - K + 1                    # after conv2

    # ---- hoisted parameter loads ----
    w1 = w1_ref[...].astype(MATMUL_DTYPE)   # (K*Cin, Chid)
    b1 = b1_ref[...]                        # (1, Chid)
    w2 = w2_ref[...].astype(MATMUL_DTYPE)   # (K*Chid, Chid)
    b2 = b2_ref[...]                        # (1, Chid)
    wh = wh_ref[...]                        # (Chid, n_out+1)
    bh = bh_ref[...]                        # (1, n_out+1)

    # ---- conv1: batch-stacked im2col -> ONE MXU matmul -> ReLU ----
    x = x_ref[...]                                                          # (B, L, Cin)
    xcol = jnp.concatenate([x[:, k:k + L1, :] for k in range(K)], axis=2)   # (B, L1, K*Cin)
    xcol = xcol.reshape(B * L1, K * Cin).astype(MATMUL_DTYPE)
    h = jnp.dot(xcol, w1, preferred_element_type=jnp.float32) + b1          # (B*L1, Chid) f32
    h = jnp.maximum(h, 0.0)

    # ---- bn1 batch statistics: two-pass, single axis-0 reductions ----
    inv_n1 = 1.0 / float(B * L1)
    mean1 = jnp.sum(h, axis=0, keepdims=True) * inv_n1                      # (1, Chid)
    d1 = h - mean1
    var1 = jnp.sum(d1 * d1, axis=0, keepdims=True) * inv_n1
    inv1 = jax.lax.rsqrt(var1 + EPS)
    shift1 = mean1 * inv1

    # ---- dropout(p=0.0) == identity; maxpool(2,2) on the RAW conv1 output
    #      (positive per-channel bn1 affine commutes with max), then bn1 is
    #      applied to the pooled tensor (half as many rows) ----
    pooled = jnp.max(h.reshape(B, L2, 2, Chid), axis=2)                     # (B, L2, Chid)
    pooled = pooled * inv1 - shift1                                         # bn1 post-pool

    # ---- conv2: batch-stacked im2col -> ONE MXU matmul -> ReLU ----
    pcol = jnp.concatenate([pooled[:, k:k + L3, :] for k in range(K)], axis=2)  # (B, L3, K*Chid)
    pcol = pcol.reshape(B * L3, K * Chid).astype(MATMUL_DTYPE)
    g = jnp.dot(pcol, w2, preferred_element_type=jnp.float32) + b2          # (B*L3, Chid) f32
    g = jnp.maximum(g, 0.0)

    # ---- bn2 statistics (two-pass), folded into the fused head weights:
    #      ((g*inv2 - shift2) @ wh + bh) == g @ (wh * inv2^T) + (bh - shift2 @ wh) ----
    inv_n2 = 1.0 / float(B * L3)
    mean2 = jnp.sum(g, axis=0, keepdims=True) * inv_n2
    d2 = g - mean2
    var2 = jnp.sum(d2 * d2, axis=0, keepdims=True) * inv_n2
    inv2 = jax.lax.rsqrt(var2 + EPS)
    shift2 = mean2 * inv2
    whf = (wh * jnp.transpose(inv2)).astype(MATMUL_DTYPE)                   # (Chid, n_out+1)
    bhf = bh - jnp.dot(shift2, wh, preferred_element_type=jnp.float32)      # (1, n_out+1)

    # ---- fused predict/attention heads: ONE matmul on raw g ----
    heads = jnp.dot(g.astype(MATMUL_DTYPE), whf,
                    preferred_element_type=jnp.float32) + bhf               # (B*L3, n_out+1)
    heads = heads.reshape(B, L3, n_heads)
    pred = heads[:, :, :n_out]                                              # (B, L3, n_out)
    logits = heads[:, :, n_out:]                                            # (B, L3, 1)

    # ---- softmax over length (per batch, f32) ----
    logits = logits - jnp.max(logits, axis=1, keepdims=True)
    e = jnp.exp(logits)
    att = e / jnp.sum(e, axis=1, keepdims=True)                             # (B, L3, 1)

    # ---- attention-weighted mean over length as a batched matvec on the MXU;
    #      single coalesced (B, n_out) output store ----
    att_t = jnp.swapaxes(att, 1, 2)                                         # (B, 1, L3)
    out = jnp.einsum("bql,blo->bqo", att_t, pred,
                     preferred_element_type=jnp.float32)                    # (B, 1, n_out)
    out_ref[...] = out.reshape(B, n_out) * (1.0 / float(L3))


def _full_spec(shape):
    nd = len(shape)
    return pl.BlockSpec(shape, lambda i, _nd=nd: (0,) * _nd)


def cnn_forward(x, params):
    """x: (B, L, n_in) float32 (channels-last of the torch (B, n_in, L) input).
    Returns edge_prob: (B, n_out) float32."""
    w1, b1, w2, b2, wp, bp, wa, ba = params
    B, L, n_in = x.shape
    Chid = w1.shape[2]
    n_out = wp.shape[1]
    L1 = L - K + 1
    assert L1 >= 2 and L1 % 2 == 0, "kernel assumes an even post-conv1 length"
    # TODO(synk): odd (L - K + 1) would need the trailing row dropped before pooling.
    assert (L1 // 2) - K + 1 >= 1, "sequence too short for conv2"

    # Wrapper-side layout plumbing only: im2col conv weights + fused heads.
    w1c = w1.reshape(K * n_in, Chid)              # rows: tap-major, channel-minor
    w2c = w2.reshape(K * Chid, Chid)
    wh = jnp.concatenate([wp, wa], axis=1)        # (Chid, n_out+1)
    bh = jnp.concatenate([bp, ba], axis=1)        # (1, n_out+1)
    args = (x, w1c, b1, w2c, b2, wh, bh)
    return pl.pallas_call(
        _cnn_kernel,
        out_shape=jax.ShapeDtypeStruct((B, n_out), jnp.float32),
        grid=(1,),
        in_specs=[_full_spec(a.shape) for a in args],
        out_specs=_full_spec((B, n_out)),
        compiler_params=pltpu.CompilerParams(
            dimension_semantics=("arbitrary",)),
    )(*args)


def init_params(key, n_in, n_hid, n_out):
    """Deterministic init mirroring CNN.init_weights (normal(0, sqrt(2/(k*out))), bias 0.1)."""
    k1, k2, k3, k4 = jax.random.split(key, 4)
    s_conv = math.sqrt(2.0 / (K * n_hid))
    w1 = jax.random.normal(k1, (K, n_in, n_hid), jnp.float32) * s_conv
    b1 = jnp.full((1, n_hid), 0.1, jnp.float32)
    w2 = jax.random.normal(k2, (K, n_hid, n_hid), jnp.float32) * s_conv
    b2 = jnp.full((1, n_hid), 0.1, jnp.float32)
    wp = jax.random.normal(k3, (n_hid, n_out), jnp.float32) * math.sqrt(2.0 / (1 * n_out))
    bp = jnp.full((1, n_out), 0.1, jnp.float32)
    wa = jax.random.normal(k4, (n_hid, 1), jnp.float32) * math.sqrt(2.0 / (1 * 1))
    ba = jnp.full((1, 1), 0.1, jnp.float32)
    return (w1, b1, w2, b2, wp, bp, wa, ba)


def reference(x, params):
    """Pure-JAX reference of the same forward pass (same (B, L, C) layout)."""
    w1, b1, w2, b2, wp, bp, wa, ba = params
    B, L, _ = x.shape
    Chid = w1.shape[2]
    L1 = L - K + 1
    h = sum(x[:, k:k + L1, :] @ w1[k] for k in range(K)) + b1
    h = jnp.maximum(h, 0.0)
    m = h.mean(axis=(0, 1), keepdims=True)
    v = ((h - m) ** 2).mean(axis=(0, 1), keepdims=True)
    h = (h - m) / jnp.sqrt(v + EPS)
    L2 = L1 // 2
    h = jnp.max(h[:, :2 * L2, :].reshape(B, L2, 2, Chid), axis=2)
    L3 = L2 - K + 1
    g = sum(h[:, k:k + L3, :] @ w2[k] for k in range(K)) + b2
    g = jnp.maximum(g, 0.0)
    m = g.mean(axis=(0, 1), keepdims=True)
    v = ((g - m) ** 2).mean(axis=(0, 1), keepdims=True)
    g = (g - m) / jnp.sqrt(v + EPS)
    pred = g @ wp + bp
    att = jax.nn.softmax(g @ wa + ba, axis=1)
    return jnp.mean(pred * att, axis=1)


if __name__ == "__main__":
    key = jax.random.PRNGKey(0)
    kx, kp = jax.random.split(key)
    B, n_in, n_hid, n_out, L = 2, 4, 32, 8, 32
    # torch-equivalent input would be (B, n_in, L) = (2, 4, 32); kernel layout is (B, L, C).
    x = jax.random.normal(kx, (B, L, n_in), jnp.float32)
    params = init_params(kp, n_in, n_hid, n_out)

    out = jax.block_until_ready(cnn_forward(x, params))
    ref = jax.block_until_ready(reference(x, params))
    np.testing.assert_allclose(np.asarray(out), np.asarray(ref), rtol=1e-3, atol=1e-3)
    print("KERNEL_OK")
</pallas_src>

<mosaic_0001>
module attributes {stable_mosaic.version = 11 : i64} {
  func.func @_cnn_kernel(%arg0: i32, %arg1: memref<2x32x4xf32, #tpu.memory_space<vmem>>, %arg2: memref<20x32xf32, #tpu.memory_space<vmem>>, %arg3: memref<1x32xf32, #tpu.memory_space<vmem>>, %arg4: memref<160x32xf32, #tpu.memory_space<vmem>>, %arg5: memref<1x32xf32, #tpu.memory_space<vmem>>, %arg6: memref<32x9xf32, #tpu.memory_space<vmem>>, %arg7: memref<1x9xf32, #tpu.memory_space<vmem>>, %arg8: memref<2x8xf32, #tpu.memory_space<vmem>>) attributes {dimension_semantics = [#tpu.dimension_semantics<arbitrary>], iteration_bounds = array<i64: 1>, scalar_prefetch = 0 : i64, scratch_operands = 0 : i64, tpu.core_type = #tpu.core_type<tc>, window_params = [{pipeline_mode = #tpu.pipeline_mode<synchronous>, transform_indices = @transform_0, window_bounds = array<i64: 2, 32, 4>}, {pipeline_mode = #tpu.pipeline_mode<synchronous>, transform_indices = @transform_1, window_bounds = array<i64: 20, 32>}, {pipeline_mode = #tpu.pipeline_mode<synchronous>, transform_indices = @transform_2, window_bounds = array<i64: 1, 32>}, {pipeline_mode = #tpu.pipeline_mode<synchronous>, transform_indices = @transform_3, window_bounds = array<i64: 160, 32>}, {pipeline_mode = #tpu.pipeline_mode<synchronous>, transform_indices = @transform_4, window_bounds = array<i64: 1, 32>}, {pipeline_mode = #tpu.pipeline_mode<synchronous>, transform_indices = @transform_5, window_bounds = array<i64: 32, 9>}, {pipeline_mode = #tpu.pipeline_mode<synchronous>, transform_indices = @transform_6, window_bounds = array<i64: 1, 9>}, {pipeline_mode = #tpu.pipeline_mode<synchronous>, transform_indices = @transform_7, window_bounds = array<i64: 2, 8>}]} {
    %c0 = arith.constant 0 : index
    %c0_0 = arith.constant 0 : index
    %0 = vector.load %arg2[%c0, %c0_0] : memref<20x32xf32, #tpu.memory_space<vmem>>, vector<20x32xf32>
    %c0_1 = arith.constant 0 : index
    %c0_2 = arith.constant 0 : index
    %1 = vector.load %arg3[%c0_1, %c0_2] : memref<1x32xf32, #tpu.memory_space<vmem>>, vector<1x32xf32>
    %c0_3 = arith.constant 0 : index
    %c0_4 = arith.constant 0 : index
    %2 = vector.load %arg4[%c0_3, %c0_4] : memref<160x32xf32, #tpu.memory_space<vmem>>, vector<160x32xf32>
    %c0_5 = arith.constant 0 : index
    %c0_6 = arith.constant 0 : index
    %3 = vector.load %arg5[%c0_5, %c0_6] : memref<1x32xf32, #tpu.memory_space<vmem>>, vector<1x32xf32>
    %c0_7 = arith.constant 0 : index
    %c0_8 = arith.constant 0 : index
    %4 = vector.load %arg6[%c0_7, %c0_8] : memref<32x9xf32, #tpu.memory_space<vmem>>, vector<32x9xf32>
    %c0_9 = arith.constant 0 : index
    %c0_10 = arith.constant 0 : index
    %5 = vector.load %arg7[%c0_9, %c0_10] : memref<1x9xf32, #tpu.memory_space<vmem>>, vector<1x9xf32>
    %c0_11 = arith.constant 0 : index
    %c0_12 = arith.constant 0 : index
    %c0_13 = arith.constant 0 : index
    %6 = vector.load %arg1[%c0_11, %c0_12, %c0_13] : memref<2x32x4xf32, #tpu.memory_space<vmem>>, vector<2x32x4xf32>
    %7 = vector.extract_strided_slice %6 {offsets = [0, 0, 0], sizes = [2, 28, 4], strides = [1, 1, 1]} : vector<2x32x4xf32> to vector<2x28x4xf32>
    %8 = vector.extract_strided_slice %6 {offsets = [0, 1, 0], sizes = [2, 28, 4], strides = [1, 1, 1]} : vector<2x32x4xf32> to vector<2x28x4xf32>
    %9 = vector.extract_strided_slice %6 {offsets = [0, 2, 0], sizes = [2, 28, 4], strides = [1, 1, 1]} : vector<2x32x4xf32> to vector<2x28x4xf32>
    %10 = vector.extract_strided_slice %6 {offsets = [0, 3, 0], sizes = [2, 28, 4], strides = [1, 1, 1]} : vector<2x32x4xf32> to vector<2x28x4xf32>
    %11 = vector.extract_strided_slice %6 {offsets = [0, 4, 0], sizes = [2, 28, 4], strides = [1, 1, 1]} : vector<2x32x4xf32> to vector<2x28x4xf32>
    %12 = tpu.concatenate %7, %8, %9, %10, %11 in 2 : vector<2x28x4xf32>, vector<2x28x4xf32>, vector<2x28x4xf32>, vector<2x28x4xf32>, vector<2x28x4xf32> -> vector<2x28x20xf32>
    %13 = vector.shape_cast %12 : vector<2x28x20xf32> to vector<56x20xf32>
    %cst = arith.constant dense<0.000000e+00> : vector<56x32xf32>
    %14 = tpu.matmul %13, %0, %cst {dimension_numbers = #tpu.dot_dimension_numbers<[1], [0], [0], [1], [0, 0, 1, 1], [], []>} : vector<56x20xf32>, vector<20x32xf32>, vector<56x32xf32> -> vector<56x32xf32>
    %15 = vector.broadcast %1 : vector<1x32xf32> to vector<56x32xf32>
    %16 = arith.addf %14, %15 : vector<56x32xf32>
    %cst_14 = arith.constant 0.000000e+00 : f32
    %17 = vector.broadcast %cst_14 : f32 to vector<56x32xf32>
    %18 = arith.maximumf %16, %17 : vector<56x32xf32>
    %cst_15 = arith.constant dense<0.000000e+00> : vector<32xf32>
    %19 = vector.multi_reduction <add>, %18, %cst_15 [0] : vector<56x32xf32> to vector<32xf32>
    %20 = vector.shape_cast %19 : vector<32xf32> to vector<1x32xf32>
    %cst_16 = arith.constant 0.0178571437 : f32
    %21 = vector.broadcast %cst_16 : f32 to vector<1x32xf32>
    %22 = arith.mulf %20, %21 : vector<1x32xf32>
    %23 = vector.broadcast %22 : vector<1x32xf32> to vector<56x32xf32>
    %24 = arith.subf %18, %23 : vector<56x32xf32>
    %25 = arith.mulf %24, %24 : vector<56x32xf32>
    %cst_17 = arith.constant dense<0.000000e+00> : vector<32xf32>
    %26 = vector.multi_reduction <add>, %25, %cst_17 [0] : vector<56x32xf32> to vector<32xf32>
    %27 = vector.shape_cast %26 : vector<32xf32> to vector<1x32xf32>
    %cst_18 = arith.constant 0.0178571437 : f32
    %28 = vector.broadcast %cst_18 : f32 to vector<1x32xf32>
    %29 = arith.mulf %27, %28 : vector<1x32xf32>
    %cst_19 = arith.constant 9.99999974E-6 : f32
    %30 = vector.broadcast %cst_19 : f32 to vector<1x32xf32>
    %31 = arith.addf %29, %30 : vector<1x32xf32>
    %32 = math.rsqrt %31 : vector<1x32xf32>
    %33 = arith.mulf %22, %32 : vector<1x32xf32>
    %34 = vector.shape_cast %18 : vector<56x32xf32> to vector<2x14x2x32xf32>
    %cst_20 = arith.constant dense<0xFF800000> : vector<2x14x32xf32>
    %35 = vector.multi_reduction <maximumf>, %34, %cst_20 [2] : vector<2x14x2x32xf32> to vector<2x14x32xf32>
    %36 = vector.shape_cast %32 : vector<1x32xf32> to vector<1x1x32xf32>
    %37 = vector.broadcast %36 : vector<1x1x32xf32> to vector<2x14x32xf32>
    %38 = arith.mulf %35, %37 : vector<2x14x32xf32>
    %39 = vector.shape_cast %33 : vector<1x32xf32> to vector<1x1x32xf32>
    %40 = vector.broadcast %39 : vector<1x1x32xf32> to vector<2x14x32xf32>
    %41 = arith.subf %38, %40 : vector<2x14x32xf32>
    %42 = vector.extract_strided_slice %41 {offsets = [0, 0, 0], sizes = [2, 10, 32], strides = [1, 1, 1]} : vector<2x14x32xf32> to vector<2x10x32xf32>
    %43 = vector.extract_strided_slice %41 {offsets = [0, 1, 0], sizes = [2, 10, 32], strides = [1, 1, 1]} : vector<2x14x32xf32> to vector<2x10x32xf32>
    %44 = vector.extract_strided_slice %41 {offsets = [0, 2, 0], sizes = [2, 10, 32], strides = [1, 1, 1]} : vector<2x14x32xf32> to vector<2x10x32xf32>
    %45 = vector.extract_strided_slice %41 {offsets = [0, 3, 0], sizes = [2, 10, 32], strides = [1, 1, 1]} : vector<2x14x32xf32> to vector<2x10x32xf32>
    %46 = vector.extract_strided_slice %41 {offsets = [0, 4, 0], sizes = [2, 10, 32], strides = [1, 1, 1]} : vector<2x14x32xf32> to vector<2x10x32xf32>
    %47 = tpu.concatenate %42, %43, %44, %45, %46 in 2 : vector<2x10x32xf32>, vector<2x10x32xf32>, vector<2x10x32xf32>, vector<2x10x32xf32>, vector<2x10x32xf32> -> vector<2x10x160xf32>
    %48 = vector.shape_cast %47 : vector<2x10x160xf32> to vector<20x160xf32>
    %cst_21 = arith.constant dense<0.000000e+00> : vector<20x32xf32>
    %49 = tpu.matmul %48, %2, %cst_21 {dimension_numbers = #tpu.dot_dimension_numbers<[1], [0], [0], [1], [0, 0, 1, 1], [], []>} : vector<20x160xf32>, vector<160x32xf32>, vector<20x32xf32> -> vector<20x32xf32>
    %50 = vector.broadcast %3 : vector<1x32xf32> to vector<20x32xf32>
    %51 = arith.addf %49, %50 : vector<20x32xf32>
    %cst_22 = arith.constant 0.000000e+00 : f32
    %52 = vector.broadcast %cst_22 : f32 to vector<20x32xf32>
    %53 = arith.maximumf %51, %52 : vector<20x32xf32>
    %cst_23 = arith.constant dense<0.000000e+00> : vector<32xf32>
    %54 = vector.multi_reduction <add>, %53, %cst_23 [0] : vector<20x32xf32> to vector<32xf32>
    %55 = vector.shape_cast %54 : vector<32xf32> to vector<1x32xf32>
    %cst_24 = arith.constant 5.000000e-02 : f32
    %56 = vector.broadcast %cst_24 : f32 to vector<1x32xf32>
    %57 = arith.mulf %55, %56 : vector<1x32xf32>
    %58 = vector.broadcast %57 : vector<1x32xf32> to vector<20x32xf32>
    %59 = arith.subf %53, %58 : vector<20x32xf32>
    %60 = arith.mulf %59, %59 : vector<20x32xf32>
    %cst_25 = arith.constant dense<0.000000e+00> : vector<32xf32>
    %61 = vector.multi_reduction <add>, %60, %cst_25 [0] : vector<20x32xf32> to vector<32xf32>
    %62 = vector.shape_cast %61 : vector<32xf32> to vector<1x32xf32>
    %cst_26 = arith.constant 5.000000e-02 : f32
    %63 = vector.broadcast %cst_26 : f32 to vector<1x32xf32>
    %64 = arith.mulf %62, %63 : vector<1x32xf32>
    %cst_27 = arith.constant 9.99999974E-6 : f32
    %65 = vector.broadcast %cst_27 : f32 to vector<1x32xf32>
    %66 = arith.addf %64, %65 : vector<1x32xf32>
    %67 = math.rsqrt %66 : vector<1x32xf32>
    %68 = arith.mulf %57, %67 : vector<1x32xf32>
    %69 = tpu.transpose %67, [1, 0] : vector<1x32xf32> -> vector<32x1xf32>
    %70 = vector.broadcast %69 : vector<32x1xf32> to vector<32x9xf32>
    %71 = arith.mulf %4, %70 : vector<32x9xf32>
    %cst_28 = arith.constant dense<0.000000e+00> : vector<1x9xf32>
    %72 = tpu.matmul %68, %4, %cst_28 {dimension_numbers = #tpu.dot_dimension_numbers<[1], [0], [0], [1], [0, 0, 1, 1], [], []>} : vector<1x32xf32>, vector<32x9xf32>, vector<1x9xf32> -> vector<1x9xf32>
    %73 = arith.subf %5, %72 : vector<1x9xf32>
    %cst_29 = arith.constant dense<0.000000e+00> : vector<20x9xf32>
    %74 = tpu.matmul %53, %71, %cst_29 {dimension_numbers = #tpu.dot_dimension_numbers<[1], [0], [0], [1], [0, 0, 1, 1], [], []>} : vector<20x32xf32>, vector<32x9xf32>, vector<20x9xf32> -> vector<20x9xf32>
    %75 = vector.broadcast %73 : vector<1x9xf32> to vector<20x9xf32>
    %76 = arith.addf %74, %75 : vector<20x9xf32>
    %77 = vector.shape_cast %76 : vector<20x9xf32> to vector<2x10x9xf32>
    %78 = vector.extract_strided_slice %77 {offsets = [0, 0, 0], sizes = [2, 10, 8], strides = [1, 1, 1]} : vector<2x10x9xf32> to vector<2x10x8xf32>
    %79 = vector.extract_strided_slice %77 {offsets = [0, 0, 8], sizes = [2, 10, 1], strides = [1, 1, 1]} : vector<2x10x9xf32> to vector<2x10x1xf32>
    %cst_30 = arith.constant dense<0xFF800000> : vector<2x1xf32>
    %80 = vector.multi_reduction <maximumf>, %79, %cst_30 [1] : vector<2x10x1xf32> to vector<2x1xf32>
    %81 = vector.shape_cast %80 : vector<2x1xf32> to vector<2x1x1xf32>
    %82 = vector.broadcast %81 : vector<2x1x1xf32> to vector<2x10x1xf32>
    %83 = arith.subf %79, %82 : vector<2x10x1xf32>
    %84 = math.exp %83 : vector<2x10x1xf32>
    %cst_31 = arith.constant dense<0.000000e+00> : vector<2x1xf32>
    %85 = vector.multi_reduction <add>, %84, %cst_31 [1] : vector<2x10x1xf32> to vector<2x1xf32>
    %86 = vector.shape_cast %85 : vector<2x1xf32> to vector<2x1x1xf32>
    %87 = vector.broadcast %86 : vector<2x1x1xf32> to vector<2x10x1xf32>
    %88 = arith.divf %84, %87 : vector<2x10x1xf32>
    %89 = tpu.transpose %88, [0, 2, 1] : vector<2x10x1xf32> -> vector<2x1x10xf32>
    "tpu.trace_start"() <{level = 10 : i32, message = "bql,blo->bqo"}> : () -> ()
    %cst_32 = arith.constant dense<0.000000e+00> : vector<2x1x8xf32>
    %90 = tpu.matmul %89, %78, %cst_32 {dimension_numbers = #tpu.dot_dimension_numbers<[2], [1], [1], [2], [0, 0, 0, 1, 1, 2], [0], [0]>} : vector<2x1x10xf32>, vector<2x10x8xf32>, vector<2x1x8xf32> -> vector<2x1x8xf32>
    "tpu.trace_stop"() : () -> ()
    %91 = vector.shape_cast %90 : vector<2x1x8xf32> to vector<2x8xf32>
    %cst_33 = arith.constant 1.000000e-01 : f32
    %92 = vector.broadcast %cst_33 : f32 to vector<2x8xf32>
    %93 = arith.mulf %91, %92 : vector<2x8xf32>
    %c0_34 = arith.constant 0 : index
    %c0_35 = arith.constant 0 : index
    %94 = vector.load %arg8[%c0_34, %c0_35] : memref<2x8xf32, #tpu.memory_space<vmem>>, vector<2x8xf32>
    tpu.vector_store %arg8[%c0_34, %c0_35], %93 {strides = array<i32>} : memref<2x8xf32, #tpu.memory_space<vmem>>, vector<2x8xf32>,
    return
  }
  func.func @transform_0(%arg0: i32) -> (i32, i32, i32) {
    %c0_i32 = arith.constant 0 : i32
    %c0_i32_0 = arith.constant 0 : i32
    %c0_i32_1 = arith.constant 0 : i32
    %c0_i32_2 = arith.constant 0 : i32
    return %c0_i32, %c0_i32_0, %c0_i32_1 : i32, i32, i32
  }
  func.func @transform_1(%arg0: i32) -> (i32, i32) {
    %c0_i32 = arith.constant 0 : i32
    %c0_i32_0 = arith.constant 0 : i32
    %c0_i32_1 = arith.constant 0 : i32
    return %c0_i32, %c0_i32_0 : i32, i32
  }
  func.func @transform_2(%arg0: i32) -> (i32, i32) {
    %c0_i32 = arith.constant 0 : i32
    %c0_i32_0 = arith.constant 0 : i32
    %c0_i32_1 = arith.constant 0 : i32
    return %c0_i32, %c0_i32_0 : i32, i32
  }
  func.func @transform_3(%arg0: i32) -> (i32, i32) {
    %c0_i32 = arith.constant 0 : i32
    %c0_i32_0 = arith.constant 0 : i32
    %c0_i32_1 = arith.constant 0 : i32
    return %c0_i32, %c0_i32_0 : i32, i32
  }
  func.func @transform_4(%arg0: i32) -> (i32, i32) {
    %c0_i32 = arith.constant 0 : i32
    %c0_i32_0 = arith.constant 0 : i32
    %c0_i32_1 = arith.constant 0 : i32
    return %c0_i32, %c0_i32_0 : i32, i32
  }
  func.func @transform_5(%arg0: i32) -> (i32, i32) {
    %c0_i32 = arith.constant 0 : i32
    %c0_i32_0 = arith.constant 0 : i32
    %c0_i32_1 = arith.constant 0 : i32
    return %c0_i32, %c0_i32_0 : i32, i32
  }
  func.func @transform_6(%arg0: i32) -> (i32, i32) {
    %c0_i32 = arith.constant 0 : i32
    %c0_i32_0 = arith.constant 0 : i32
    %c0_i32_1 = arith.constant 0 : i32
    return %c0_i32, %c0_i32_0 : i32, i32
  }
  func.func @transform_7(%arg0: i32) -> (i32, i32) {
    %c0_i32 = arith.constant 0 : i32
    %c0_i32_0 = arith.constant 0 : i32
    %c0_i32_1 = arith.constant 0 : i32
    return %c0_i32, %c0_i32_0 : i32, i32
  }
}

</mosaic_0001>

<llo_original>
// kernel: tpu_custom_call.1
$region0: #{tpu_custom_call.1}
  #allocation0 [shape = 'u32[]', space=smem, size = 0x4, offset = 0x4, fixed_abs, tag = 'smem constant byte address 0x4 - core index']
  #allocation1 [shape = 'u32[144,128]{1,0:T(1,128)}', space=vmem, size = 0x12000, scoped, tag = 'internal scratch']
  %s0 = inlined_call_operand.vmem [shape: f32[2,32,4], index: 0, kind: input, shape index: {}]
  %s1 = inlined_call_operand.vmem [shape: f32[20,32], index: 1, kind: input, shape index: {}]
  %s2 = inlined_call_operand.vmem [shape: f32[1,32], index: 2, kind: input, shape index: {}]
  %s3 = inlined_call_operand.vmem [shape: f32[160,32], index: 3, kind: input, shape index: {}]
  %s4 = inlined_call_operand.vmem [shape: f32[1,32], index: 4, kind: input, shape index: {}]
  %s5 = inlined_call_operand.vmem [shape: f32[32,9], index: 5, kind: input, shape index: {}]
  %s6 = inlined_call_operand.vmem [shape: f32[1,9], index: 6, kind: input, shape index: {}]
  %s7 = inlined_call_operand.hbm [shape: f32[2,8], index: 7, kind: output, shape index: {}]
  %s8 = sld [smem:[#allocation0]]
  $region38: #{tpu_custom_call.1} parent=0
    _
  %s10 = ssub.s32 1, %s8
  %s11 = scalar_select 0, %s10, %s8
  $region1: #{tpu_custom_call.1} parent=0
    #allocation2 [shape = 'u8[1024]{0}', space=vmem, size = 0x400, scoped, tag = 'output window, operand 0, single buffered']
    #allocation3 [shape = 's32[1]{0}', space=sflag, size = 0x4, scoped, tag = 'scoped memory for tpu_custom_call.1']
    %12 = vsyncpa [#allocation3], 0
    // Predicated region
    $region2: #{tpu_custom_call.1} parent=1 // pred_check
      _
    $region3: #{tpu_custom_call.1} parent=1 // pred_check_branch
      %14 = sbr.rel (0) target = $region5
    $region4: #{tpu_custom_call.1} parent=1 // pred_region
      _
    $region5: #{tpu_custom_call.1} parent=1 // pred_fallthru
      _
    // Predicated region
    $region6: #{tpu_custom_call.1} parent=1 // pred_check
      _
    $region7: #{tpu_custom_call.1} parent=1 // pred_check_branch
      %16 = sbr.rel (0) target = $region9
    $region8: #{tpu_custom_call.1} parent=1 // pred_region
      _
    $region9: #{tpu_custom_call.1} parent=1 // pred_fallthru
      _
    // Predicated region
    $region10: #{tpu_custom_call.1} parent=1 // pred_check
      _
    $region11: #{tpu_custom_call.1} parent=1 // pred_check_branch
      %18 = sbr.rel (0) target = $region13
    $region12: #{tpu_custom_call.1} parent=1 // pred_region
      _
    $region13: #{tpu_custom_call.1} parent=1 // pred_fallthru
      _
    // Predicated region
    $region14: #{tpu_custom_call.1} parent=1 // pred_check
      _
    $region15: #{tpu_custom_call.1} parent=1 // pred_check_branch
      %20 = sbr.rel (0) target = $region17
    $region16: #{tpu_custom_call.1} parent=1 // pred_region
      _
    $region17: #{tpu_custom_call.1} parent=1 // pred_fallthru
      _
    // Predicated region
    $region18: #{tpu_custom_call.1} parent=1 // pred_check
      _
    $region19: #{tpu_custom_call.1} parent=1 // pred_check_branch
      %22 = sbr.rel (0) target = $region21
    $region20: #{tpu_custom_call.1} parent=1 // pred_region
      _
    $region21: #{tpu_custom_call.1} parent=1 // pred_fallthru
      _
    // Predicated region
    $region22: #{tpu_custom_call.1} parent=1 // pred_check
      _
    $region23: #{tpu_custom_call.1} parent=1 // pred_check_branch
      %24 = sbr.rel (0) target = $region25
    $region24: #{tpu_custom_call.1} parent=1 // pred_region
      _
    $region25: #{tpu_custom_call.1} parent=1 // pred_fallthru
      _
    // Predicated region
    $region26: #{tpu_custom_call.1} parent=1 // pred_check
      _
    $region27: #{tpu_custom_call.1} parent=1 // pred_check_branch
      %26 = sbr.rel (0) target = $region29
    $region28: #{tpu_custom_call.1} parent=1 // pred_region
      _
    $region29: #{tpu_custom_call.1} parent=1 // pred_fallthru
      _
    %v27 = vld [vmem:[%s1] sm:$0xff]
    %v28 = vld [vmem:[%s1 + $0x8] sm:$0xff]
    %v29 = vld [vmem:[%s1 + $0x10] sm:$0xf]
    %v30 = vld [vmem:[%s2] sm:$0x1]
    %v31 = vld [vmem:[%s3] sm:$0xff]
    %v32 = vld [vmem:[%s3 + $0x8] sm:$0xff]
    %v33 = vld [vmem:[%s3 + $0x10] sm:$0xff]
    %v34 = vld [vmem:[%s3 + $0x18] sm:$0xff]
    %v35 = vld [vmem:[%s3 + $0x20] sm:$0xff]
    %v36 = vld [vmem:[%s3 + $0x28] sm:$0xff]
    %v37 = vld [vmem:[%s3 + $0x30] sm:$0xff]
    %v38 = vld [vmem:[%s3 + $0x38] sm:$0xff]
    %v39 = vld [vmem:[%s3 + $0x40] sm:$0xff]
    %v40 = vld [vmem:[%s3 + $0x48] sm:$0xff]
    %v41 = vld [vmem:[%s3 + $0x50] sm:$0xff]
    %v42 = vld [vmem:[%s3 + $0x58] sm:$0xff]
    %v43 = vld [vmem:[%s3 + $0x60] sm:$0xff]
    %v44 = vld [vmem:[%s3 + $0x68] sm:$0xff]
    %v45 = vld [vmem:[%s3 + $0x70] sm:$0xff]
    %v46 = vld [vmem:[%s3 + $0x78] sm:$0xff]
    %v47 = vld [vmem:[%s3 + $0x80] sm:$0xff]
    %v48 = vld [vmem:[%s3 + $0x88] sm:$0xff]
    %v49 = vld [vmem:[%s3 + $0x90] sm:$0xff]
    %v50 = vld [vmem:[%s3 + $0x98] sm:$0xff]
    %v51 = vld [vmem:[%s4] sm:$0x1]
    %v52 = vld [vmem:[%s5] sm:$0xff]
    %v53 = vld [vmem:[%s5 + $0x8] sm:$0xff]
    %v54 = vld [vmem:[%s5 + $0x10] sm:$0xff]
    %v55 = vld [vmem:[%s5 + $0x18] sm:$0xff]
    %v56 = vld [vmem:[%s6] sm:$0x1]
    %v57 = vld [vmem:[%s0] sm:$0xff]
    %v58 = vld [vmem:[%s0 + $0x8] sm:$0xff]
    %v59 = vld [vmem:[%s0 + $0x10] sm:$0xff]
    %v60 = vld [vmem:[%s0 + $0x18] sm:$0xff]
    %v61 = vld [vmem:[%s0 + $0x20] sm:$0xff]
    %v62 = vld [vmem:[%s0 + $0x28] sm:$0xff]
    %v63 = vld [vmem:[%s0 + $0x30] sm:$0xff]
    %v64 = vld [vmem:[%s0 + $0x38] sm:$0xff]
    %vm73 = vcmask 1046528
    %v74 = vrot.slane %v57, 1
    %v75 = vrot.slane %v58, 1
    %v76 = vsel %vm73, %v74, %v75
    %v77 = vrot.slane %v59, 1
    %v78 = vsel %vm73, %v75, %v77
    %v79 = vrot.slane %v60, 1
    %v80 = vsel %vm73, %v77, %v79
    %v81 = vrot.slane %v61, 1
    %v82 = vrot.slane %v62, 1
    %v83 = vsel %vm73, %v81, %v82
    %v84 = vrot.slane %v63, 1
    %v85 = vsel %vm73, %v82, %v84
    %v86 = vrot.slane %v64, 1
    %v87 = vsel %vm73, %v84, %v86
    %88 = vrot.lane.b32.xlu0 %v76, 4
    %v89 = vpop.permute.xlu0 %88
    %90 = vrot.lane.b32.xlu0 %v78, 4
    %v91 = vpop.permute.xlu0 %90
    %92 = vrot.lane.b32.xlu0 %v80, 4
    %v93 = vpop.permute.xlu0 %92
    %94 = vrot.lane.b32.xlu0 %v79, 4
    %v95 = vpop.permute.xlu0 %94
    %96 = vrot.lane.b32.xlu0 %v83, 4
    %v97 = vpop.permute.xlu0 %96
    %98 = vrot.lane.b32.xlu0 %v85, 4
    %v99 = vpop.permute.xlu0 %98
    %100 = vrot.lane.b32.xlu0 %v87, 4
    %v101 = vpop.permute.xlu0 %100
    %102 = vrot.lane.b32.xlu0 %v86, 4
    %v103 = vpop.permute.xlu0 %102
    %vm112 = vcmask 1045504
    %v113 = vrot.slane %v57, 2
    %v114 = vrot.slane %v58, 2
    %v115 = vsel %vm112, %v113, %v114
    %v116 = vrot.slane %v59, 2
    %v117 = vsel %vm112, %v114, %v116
    %v118 = vrot.slane %v60, 2
    %v119 = vsel %vm112, %v116, %v118
    %v120 = vrot.slane %v61, 2
    %v121 = vrot.slane %v62, 2
    %v122 = vsel %vm112, %v120, %v121
    %v123 = vrot.slane %v63, 2
    %v124 = vsel %vm112, %v121, %v123
    %v125 = vrot.slane %v64, 2
    %v126 = vsel %vm112, %v123, %v125
    %127 = vrot.lane.b32.xlu0 %v115, 8
    %v128 = vpop.permute.xlu0 %127
    %129 = vrot.lane.b32.xlu0 %v117, 8
    %v130 = vpop.permute.xlu0 %129
    %131 = vrot.lane.b32.xlu0 %v119, 8
    %v132 = vpop.permute.xlu0 %131
    %133 = vrot.lane.b32.xlu0 %v118, 8
    %v134 = vpop.permute.xlu0 %133
    %135 = vrot.lane.b32.xlu0 %v122, 8
    %v136 = vpop.permute.xlu0 %135
    %137 = vrot.lane.b32.xlu0 %v124, 8
    %v138 = vpop.permute.xlu0 %137
    %139 = vrot.lane.b32.xlu0 %v126, 8
    %v140 = vpop.permute.xlu0 %139
    %141 = vrot.lane.b32.xlu0 %v125, 8
    %v142 = vpop.permute.xlu0 %141
    %vm151 = vcmask 1044480
    %v152 = vrot.slane %v57, 3
    %v153 = vrot.slane %v58, 3
    %v154 = vsel %vm151, %v152, %v153
    %v155 = vrot.slane %v59, 3
    %v156 = vsel %vm151, %v153, %v155
    %v157 = vrot.slane %v60, 3
    %v158 = vsel %vm151, %v155, %v157
    %v159 = vrot.slane %v61, 3
    %v160 = vrot.slane %v62, 3
    %v161 = vsel %vm151, %v159, %v160
    %v162 = vrot.slane %v63, 3
    %v163 = vsel %vm151, %v160, %v162
    %v164 = vrot.slane %v64, 3
    %v165 = vsel %vm151, %v162, %v164
    %166 = vrot.lane.b32.xlu0 %v154, 12
    %v167 = vpop.permute.xlu0 %166
    %168 = vrot.lane.b32.xlu0 %v156, 12
    %v169 = vpop.permute.xlu0 %168
    %170 = vrot.lane.b32.xlu0 %v158, 12
    %v171 = vpop.permute.xlu0 %170
    %172 = vrot.lane.b32.xlu0 %v157, 12
    %v173 = vpop.permute.xlu0 %172
    %174 = vrot.lane.b32.xlu0 %v161, 12
    %v175 = vpop.permute.xlu0 %174
    %176 = vrot.lane.b32.xlu0 %v163, 12
    %v177 = vpop.permute.xlu0 %176
    %178 = vrot.lane.b32.xlu0 %v165, 12
    %v179 = vpop.permute.xlu0 %178
    %180 = vrot.lane.b32.xlu0 %v164, 12
    %v181 = vpop.permute.xlu0 %180
    %vm190 = vcmask 1043456
    %v191 = vrot.slane %v57, 4
    %v192 = vrot.slane %v58, 4
    %v193 = vsel %vm190, %v191, %v192
    %v194 = vrot.slane %v59, 4
    %v195 = vsel %vm190, %v192, %v194
    %v196 = vrot.slane %v60, 4
    %v197 = vsel %vm190, %v194, %v196
    %v198 = vrot.slane %v61, 4
    %v199 = vrot.slane %v62, 4
    %v200 = vsel %vm190, %v198, %v199
    %v201 = vrot.slane %v63, 4
    %v202 = vsel %vm190, %v199, %v201
    %v203 = vrot.slane %v64, 4
    %v204 = vsel %vm190, %v201, %v203
    %205 = vrot.lane.b32.xlu0 %v193, 16
    %v206 = vpop.permute.xlu0 %205
    %207 = vrot.lane.b32.xlu0 %v195, 16
    %v208 = vpop.permute.xlu0 %207
    %209 = vrot.lane.b32.xlu0 %v197, 16
    %v210 = vpop.permute.xlu0 %209
    %211 = vrot.lane.b32.xlu0 %v196, 16
    %v212 = vpop.permute.xlu0 %211
    %213 = vrot.lane.b32.xlu0 %v200, 16
    %v214 = vpop.permute.xlu0 %213
    %215 = vrot.lane.b32.xlu0 %v202, 16
    %v216 = vpop.permute.xlu0 %215
    %217 = vrot.lane.b32.xlu0 %v204, 16
    %v218 = vpop.permute.xlu0 %217
    %219 = vrot.lane.b32.xlu0 %v203, 16
    %v220 = vpop.permute.xlu0 %219
    %vm229 = vcmask 31744
    %v230 = vsel %vm229, %v57, %v89
    %v231 = vsel %vm229, %v58, %v91
    %v232 = vsel %vm229, %v59, %v93
    %v233 = vsel %vm229, %v60, %v95
    %v234 = vsel %vm229, %v61, %v97
    %v235 = vsel %vm229, %v62, %v99
    %v236 = vsel %vm229, %v63, %v101
    %v237 = vsel %vm229, %v64, %v103
    %vm238 = vcmask 64512
    %v239 = vsel %vm238, %v230, %v128
    %v240 = vsel %vm238, %v231, %v130
    %v241 = vsel %vm238, %v232, %v132
    %v242 = vsel %vm238, %v233, %v134
    %v243 = vsel %vm238, %v234, %v136
    %v244 = vsel %vm238, %v235, %v138
    %v245 = vsel %vm238, %v236, %v140
    %v246 = vsel %vm238, %v237, %v142
    %vm247 = vcmask 97280
    %v248 = vsel %vm247, %v239, %v167
    %v249 = vsel %vm247, %v240, %v169
    %v250 = vsel %vm247, %v241, %v171
    %v251 = vsel %vm247, %v242, %v173
    %v252 = vsel %vm247, %v243, %v175
    %v253 = vsel %vm247, %v244, %v177
    %v254 = vsel %vm247, %v245, %v179
    %v255 = vsel %vm247, %v246, %v181
    %vm256 = vcmask 130048
    %v257 = vsel %vm256, %v248, %v206
    %v258 = vsel %vm256, %v249, %v208
    %v259 = vsel %vm256, %v250, %v210
    %v260 = vsel %vm256, %v251, %v212
    %v261 = vsel %vm256, %v252, %v214
    %v262 = vsel %vm256, %v253, %v216
    %v263 = vsel %vm256, %v254, %v218
    %v264 = vsel %vm256, %v255, %v220
    %v273 = vcombine.high %v257, %v257
    %v274 = vcombine.high %v258, %v258
    %v275 = vcombine.high %v259, %v259
    %v276 = vcombine.high %v261, %v261
    %v277 = vcombine.high %v262, %v262
    %v278 = vcombine.high %v263, %v263
    %v280 = vlaneseq
    %v281 = vshrl.u32 %v280, 7
    %v282 = vsub.s32 0, %v281
    %v283 = vrot.slane %v30, %v282
    %v285 = vcombine.low %v257, %v273
    %v286 = vcombine.low %v258, %v274
    %v287 = vcombine.low %v259, %v275
    %v288 = vcombine.low %v260, %v261
    %v289 = vcombine.low %v276, %v262
    %v290 = vcombine.low %v277, %v263
    %v291 = vcombine.low %v278, %v264
    %vm292 = vcmask 162816
    %v293 = vsel %vm292, %v285, 0
    %v295 = vsel %vm292, %v286, 0
    %v297 = vsel %vm292, %v287, 0
    %v299 = vsel %vm292, %v288, 0
    %v301 = vsel %vm292, %v289, 0
    %v303 = vsel %vm292, %v290, 0
    %v305 = vsel %vm292, %v291, 0
    %v308 = vsel %vm190, %v29, 0
    %310 = vmatprep.subr.mxu0 0.0
    %311 = vmatpush1.msra.mxu0 %v27
    %312 = vmatprep.subr.mxu0 0.0
    %313 = vmatpush1.msra.mxu0 %v28
    %314 = vmatprep.subr.mxu0 0.0
    %315 = vmatpush1.msra.mxu0 %v308
    %316 = vmatprep.subr.mxu0 0.0
    %317 = vmatpush1.msra.mxu0 0.0
    %318 = vmatprep.subr.mxu0 0.0
    %319 = vmatpush1.msra.mxu0 0.0
    %320 = vmatprep.subr.mxu0 0.0
    %321 = vmatpush1.msra.mxu0 0.0
    %322 = vmatprep.subr.mxu0 0.0
    %323 = vmatpush1.msra.mxu0 0.0
    %324 = vmatprep.subr.mxu0 0.0
    %325 = vmatpush1.msra.mxu0 0.0
    %326 = vmatprep.subr.mxu0 0.0
    %327 = vmatpush1.msra.mxu0 0.0
    %328 = vmatprep.subr.mxu0 0.0
    %329 = vmatpush1.msra.mxu0 0.0
    %330 = vmatprep.subr.mxu0 0.0
    %331 = vmatpush1.msra.mxu0 0.0
    %332 = vmatprep.subr.mxu0 0.0
    %333 = vmatpush1.msra.mxu0 0.0
    %334 = vmatprep.subr.mxu0 0.0
    %335 = vmatpush1.msra.mxu0 0.0
    %336 = vmatprep.subr.mxu0 0.0
    %337 = vmatpush1.msra.mxu0 0.0
    %338 = vmatprep.subr.mxu0 0.0
    %339 = vmatpush1.msra.mxu0 0.0
    %340 = vmatprep.subr.mxu0 0.0
    %341 = vmatpush1.msra.mxu0 0.0
    %342 = vmatprep.subr.mxu0 0.0
    %343 = vmatpush1.msra.mxu0 0.0
    %344 = vmatprep.subr.mxu0 0.0
    %345 = vmatpush1.msra.mxu0 0.0
    %346 = vmatprep.subr.mxu0 0.0
    %347 = vmatpush1.msra.mxu0 0.0
    %348 = vmatprep.subr.mxu0 0.0
    %349 = vmatpush1.msra.mxu0 0.0
    %350 = vmatprep.subr.mxu0 0.0
    %351 = vmatpush1.msra.mxu0 0.0
    %352 = vmatprep.subr.mxu0 0.0
    %353 = vmatpush1.msra.mxu0 0.0
    %354 = vmatprep.subr.mxu0 0.0
    %355 = vmatpush1.msra.mxu0 0.0
    %356 = vmatprep.subr.mxu0 0.0
    %357 = vmatpush1.msra.mxu0 0.0
    %358 = vmatprep.subr.mxu0 0.0
    %359 = vmatpush1.msra.mxu0 0.0
    %360 = vmatprep.subr.mxu0 0.0
    %361 = vmatpush1.msra.mxu0 0.0
    %362 = vmatprep.subr.mxu0 0.0
    %363 = vmatpush1.msra.mxu0 0.0
    %364 = vmatprep.subr.mxu0 0.0
    %365 = vmatpush1.msra.mxu0 0.0
    %366 = vmatprep.subr.mxu0 0.0
    %367 = vmatpush1.msra.mxu0 0.0
    %368 = vmatprep.subr.mxu0 0.0
    %369 = vmatpush1.msra.mxu0 0.0
    %370 = vmatprep.subr.mxu0 0.0
    %371 = vmatpush1.msra.mxu0 0.0
    %372 = vmatprep.subr.mxu0 0.0
    %373 = vmatpush1.msra.mxu0 0.0
    %374 = vmatprep.mubr.f32.mxu0 0.0
    %375 = vmatmul.mubr.f32.gmra.mrb[0].mxu0 %v293
    %v376 = vpop.f32.mrb[0].mxu0
    %v377 = vadd.f32 %v283, %v376
    %v378 = vpop.f32.mrb[0].mxu0
    %379 = vmatprep.mubr.f32.mxu0 0.0
    %380 = vmatmul.mubr.f32.gmra.mrb[0].mxu0 %v295
    %v381 = vpop.f32.mrb[0].mxu0
    %v382 = vadd.f32 %v283, %v381
    %v383 = vpop.f32.mrb[0].mxu0
    %384 = vmatprep.mubr.f32.mxu0 0.0
    %385 = vmatmul.mubr.f32.gmra.mrb[0].mxu0 %v297
    %v386 = vpop.f32.mrb[0].mxu0
    %v387 = vadd.f32 %v283, %v386
    %v388 = vpop.f32.mrb[0].mxu0
    %389 = vmatprep.mubr.f32.mxu0 0.0
    %390 = vmatmul.mubr.f32.gmra.mrb[0].mxu0 %v299
    %v391 = vpop.f32.mrb[0].mxu0
    %v392 = vadd.f32 %v283, %v391
    %v393 = vpop.f32.mrb[0].mxu0
    %394 = vmatprep.mubr.f32.mxu0 0.0
    %395 = vmatmul.mubr.f32.gmra.mrb[0].mxu0 %v301
    %v396 = vpop.f32.mrb[0].mxu0
    %v397 = vadd.f32 %v283, %v396
    %v398 = vpop.f32.mrb[0].mxu0
    %399 = vmatprep.mubr.f32.mxu0 0.0
    %400 = vmatmul.mubr.f32.gmra.mrb[0].mxu0 %v303
    %v401 = vpop.f32.mrb[0].mxu0
    %v402 = vadd.f32 %v283, %v401
    %v403 = vpop.f32.mrb[0].mxu0
    %404 = vmatprep.mubr.f32.mxu0 0.0
    %405 = vmatmul.mubr.f32.gmra.mrb[0].mxu0 %v305
    %v406 = vpop.f32.mrb[0].mxu0
    %v407 = vadd.f32 %v283, %v406
    %v408 = vpop.f32.mrb[0].mxu0
    %409 = vdwg.mxu0
    %v410 = vmax.f32 %v377, 0.0
    %v411 = vmax.f32 %v382, 0.0
    %v412 = vmax.f32 %v387, 0.0
    %v413 = vmax.f32 %v392, 0.0
    %v414 = vmax.f32 %v397, 0.0
    %v415 = vmax.f32 %v402, 0.0
    %v416 = vmax.f32 %v407, 0.0
    %vm417 = vcmask 261120
    %v418 = vsel %vm417, %v410, 0.0
    %v419 = vsel %vm417, %v411, 0.0
    %v420 = vadd.f32 %v418, %v419
    %v421 = vsel %vm417, %v412, 0.0
    %v422 = vadd.f32 %v420, %v421
    %v423 = vsel %vm417, %v413, 0.0
    %v424 = vadd.f32 %v422, %v423
    %v425 = vsel %vm417, %v414, 0.0
    %v426 = vadd.f32 %v424, %v425
    %v427 = vsel %vm417, %v415, 0.0
    %v428 = vadd.f32 %v426, %v427
    %v429 = vsel %vm417, %v416, 0.0
    %v430 = vadd.f32 %v428, %v429
    %v431 = vrot.slane %v430, 4
    %v432 = vadd.f32 %v430, %v431
    %v433 = vrot.slane %v432, 2
    %v434 = vadd.f32 %v432, %v433
    %v435 = vrot.slane %v434, 1
    %v436 = vadd.f32 %v434, %v435
    %v437 = vmul.f32 %v436, 0.017857144
    %v438 = vsub.f32 %v410, %v437
    %v439 = vsub.f32 %v411, %v437
    %v440 = vsub.f32 %v412, %v437
    %v441 = vsub.f32 %v413, %v437
    %v442 = vsub.f32 %v414, %v437
    %v443 = vsub.f32 %v415, %v437
    %v444 = vsub.f32 %v416, %v437
    %v445 = vmul.f32 %v438, %v438
    %v446 = vmul.f32 %v439, %v439
    %v447 = vmul.f32 %v440, %v440
    %v448 = vmul.f32 %v441, %v441
    %v449 = vmul.f32 %v442, %v442
    %v450 = vmul.f32 %v443, %v443
    %v451 = vmul.f32 %v444, %v444
    %v452 = vsel %vm417, %v445, 0.0
    %v453 = vsel %vm417, %v446, 0.0
    %v454 = vadd.f32 %v452, %v453
    %v455 = vsel %vm417, %v447, 0.0
    %v456 = vadd.f32 %v454, %v455
    %v457 = vsel %vm417, %v448, 0.0
    %v458 = vadd.f32 %v456, %v457
    %v459 = vsel %vm417, %v449, 0.0
    %v460 = vadd.f32 %v458, %v459
    %v461 = vsel %vm417, %v450, 0.0
    %v462 = vadd.f32 %v460, %v461
    %v463 = vsel %vm417, %v451, 0.0
    %v464 = vadd.f32 %v462, %v463
    %v465 = vrot.slane %v464, 4
    %v466 = vadd.f32 %v464, %v465
    %v467 = vrot.slane %v466, 2
    %v468 = vadd.f32 %v466, %v467
    %v469 = vrot.slane %v468, 1
    %v470 = vadd.f32 %v468, %v469
    %v471 = vmul.f32 %v470, 0.017857144
    %v472 = vadd.f32 %v471, 1e-05
    %v473 = vrsqrt.pop %v472
    %v474 = vmul.f32 %v437, %v473
    %v482 = vcombine.high %v410, %v410
    %v484 = vunpack.c.l.s4 1983009808
    %v485 = vunpack.c.0.s8 %v484
    %v486 = vlaneseq
    %v487 = vshrl.u32 %v486, 7
    %v488 = vsub.s32 %v485, %v487
    %v489 = vrot.slane %v410, %v488
    %v491 = vunpack.c.l.s4 1983009808
    %v492 = vunpack.c.0.s8 %v491
    %v493 = vlaneseq
    %v494 = vshrl.u32 %v493, 7
    %v495 = vsub.s32 %v492, %v494
    %v496 = vrot.slane %v482, %v495
    %v497 = vcombine.high %v489, %v489
    %v498 = vcombine.high %v496, %v496
    %v499 = vcombine.high %v411, %v411
    %v501 = vunpack.c.l.s4 1983009808
    %v502 = vunpack.c.0.s8 %v501
    %v503 = vlaneseq
    %v504 = vshrl.u32 %v503, 7
    %v505 = vsub.s32 %v502, %v504
    %v506 = vrot.slane %v411, %v505
    %v508 = vunpack.c.l.s4 1983009808
    %v509 = vunpack.c.0.s8 %v508
    %v510 = vlaneseq
    %v511 = vshrl.u32 %v510, 7
    %v512 = vsub.s32 %v509, %v511
    %v513 = vrot.slane %v499, %v512
    %v514 = vcombine.high %v506, %v506
    %v515 = vcombine.high %v513, %v513
    %v516 = vcombine.high %v412, %v412
    %v518 = vunpack.c.l.s4 1983009808
    %v519 = vunpack.c.0.s8 %v518
    %v520 = vlaneseq
    %v521 = vshrl.u32 %v520, 7
    %v522 = vsub.s32 %v519, %v521
    %v523 = vrot.slane %v412, %v522
    %v525 = vunpack.c.l.s4 1983009808
    %v526 = vunpack.c.0.s8 %v525
    %v527 = vlaneseq
    %v528 = vshrl.u32 %v527, 7
    %v529 = vsub.s32 %v526, %v528
    %v530 = vrot.slane %v516, %v529
    %v531 = vcombine.high %v523, %v523
    %v532 = vcombine.high %v530, %v530
    %v533 = vcombine.high %v413, %v413
    %v535 = vunpack.c.l.s4 1983009808
    %v536 = vunpack.c.0.s8 %v535
    %v537 = vlaneseq
    %v538 = vshrl.u32 %v537, 7
    %v539 = vsub.s32 %v536, %v538
    %v540 = vrot.slane %v413, %v539
    %v542 = vunpack.c.l.s4 1983009808
    %v543 = vunpack.c.0.s8 %v542
    %v544 = vlaneseq
    %v545 = vshrl.u32 %v544, 7
    %v546 = vsub.s32 %v543, %v545
    %v547 = vrot.slane %v533, %v546
    %v548 = vcombine.high %v540, %v540
    %v549 = vcombine.high %v547, %v547
    %v550 = vcombine.high %v414, %v414
    %v552 = vunpack.c.l.s4 1983009808
    %v553 = vunpack.c.0.s8 %v552
    %v554 = vlaneseq
    %v555 = vshrl.u32 %v554, 7
    %v556 = vsub.s32 %v553, %v555
    %v557 = vrot.slane %v414, %v556
    %v559 = vunpack.c.l.s4 1983009808
    %v560 = vunpack.c.0.s8 %v559
    %v561 = vlaneseq
    %v562 = vshrl.u32 %v561, 7
    %v563 = vsub.s32 %v560, %v562
    %v564 = vrot.slane %v550, %v563
    %v565 = vcombine.high %v557, %v557
    %v566 = vcombine.high %v564, %v564
    %v567 = vcombine.high %v415, %v415
    %v569 = vunpack.c.l.s4 1983009808
    %v570 = vunpack.c.0.s8 %v569
    %v571 = vlaneseq
    %v572 = vshrl.u32 %v571, 7
    %v573 = vsub.s32 %v570, %v572
    %v574 = vrot.slane %v415, %v573
    %v576 = vunpack.c.l.s4 1983009808
    %v577 = vunpack.c.0.s8 %v576
    %v578 = vlaneseq
    %v579 = vshrl.u32 %v578, 7
    %v580 = vsub.s32 %v577, %v579
    %v581 = vrot.slane %v567, %v580
    %v582 = vcombine.high %v574, %v574
    %v583 = vcombine.high %v581, %v581
    %v584 = vcombine.high %v416, %v416
    %v586 = vunpack.c.l.s4 1983009808
    %v587 = vunpack.c.0.s8 %v586
    %v588 = vlaneseq
    %v589 = vshrl.u32 %v588, 7
    %v590 = vsub.s32 %v587, %v589
    %v591 = vrot.slane %v416, %v590
    %v593 = vunpack.c.l.s4 1983009808
    %v594 = vunpack.c.0.s8 %v593
    %v595 = vlaneseq
    %v596 = vshrl.u32 %v595, 7
    %v597 = vsub.s32 %v594, %v596
    %v598 = vrot.slane %v584, %v597
    %v599 = vcombine.high %v591, %v591
    %v600 = vcombine.high %v598, %v598
    %vm629 = vcmask 254976
    %v630 = vsel %vm629, %v489, -inf
    %v631 = vrot.slane %v630, 4
    %v632 = vmax.f32 %v630, %v631
    %v633 = vrot.slane %v632, 2
    %v634 = vmax.f32 %v632, %v633
    %v635 = vrot.slane %v634, 1
    %v636 = vmax.f32 %v634, %v635
    %v637 = vsel %vm629, %v497, -inf
    %v638 = vrot.slane %v637, 4
    %v639 = vmax.f32 %v637, %v638
    %v640 = vrot.slane %v639, 2
    %v641 = vmax.f32 %v639, %v640
    %v642 = vrot.slane %v641, 1
    %v643 = vmax.f32 %v641, %v642
    %v644 = vsel %vm629, %v496, -inf
    %v645 = vrot.slane %v644, 4
    %v646 = vmax.f32 %v644, %v645
    %v647 = vrot.slane %v646, 2
    %v648 = vmax.f32 %v646, %v647
    %v649 = vrot.slane %v648, 1
    %v650 = vmax.f32 %v648, %v649
    %v651 = vsel %vm629, %v498, -inf
    %v652 = vrot.slane %v651, 4
    %v653 = vmax.f32 %v651, %v652
    %v654 = vrot.slane %v653, 2
    %v655 = vmax.f32 %v653, %v654
    %v656 = vrot.slane %v655, 1
    %v657 = vmax.f32 %v655, %v656
    %v658 = vsel %vm629, %v506, -inf
    %v659 = vrot.slane %v658, 4
    %v660 = vmax.f32 %v658, %v659
    %v661 = vrot.slane %v660, 2
    %v662 = vmax.f32 %v660, %v661
    %v663 = vrot.slane %v662, 1
    %v664 = vmax.f32 %v662, %v663
    %v665 = vsel %vm629, %v514, -inf
    %v666 = vrot.slane %v665, 4
    %v667 = vmax.f32 %v665, %v666
    %v668 = vrot.slane %v667, 2
    %v669 = vmax.f32 %v667, %v668
    %v670 = vrot.slane %v669, 1
    %v671 = vmax.f32 %v669, %v670
    %v672 = vsel %vm629, %v513, -inf
    %v673 = vrot.slane %v672, 4
    %v674 = vmax.f32 %v672, %v673
    %v675 = vrot.slane %v674, 2
    %v676 = vmax.f32 %v674, %v675
    %v677 = vrot.slane %v676, 1
    %v678 = vmax.f32 %v676, %v677
    %v679 = vsel %vm629, %v515, -inf
    %v680 = vrot.slane %v679, 4
    %v681 = vmax.f32 %v679, %v680
    %v682 = vrot.slane %v681, 2
    %v683 = vmax.f32 %v681, %v682
    %v684 = vrot.slane %v683, 1
    %v685 = vmax.f32 %v683, %v684
    %v686 = vsel %vm629, %v523, -inf
    %v687 = vrot.slane %v686, 4
    %v688 = vmax.f32 %v686, %v687
    %v689 = vrot.slane %v688, 2
    %v690 = vmax.f32 %v688, %v689
    %v691 = vrot.slane %v690, 1
    %v692 = vmax.f32 %v690, %v691
    %v693 = vsel %vm629, %v531, -inf
    %v694 = vrot.slane %v693, 4
    %v695 = vmax.f32 %v693, %v694
    %v696 = vrot.slane %v695, 2
    %v697 = vmax.f32 %v695, %v696
    %v698 = vrot.slane %v697, 1
    %v699 = vmax.f32 %v697, %v698
    %v700 = vsel %vm629, %v530, -inf
    %v701 = vrot.slane %v700, 4
    %v702 = vmax.f32 %v700, %v701
    %v703 = vrot.slane %v702, 2
    %v704 = vmax.f32 %v702, %v703
    %v705 = vrot.slane %v704, 1
    %v706 = vmax.f32 %v704, %v705
    %v707 = vsel %vm629, %v532, -inf
    %v708 = vrot.slane %v707, 4
    %v709 = vmax.f32 %v707, %v708
    %v710 = vrot.slane %v709, 2
    %v711 = vmax.f32 %v709, %v710
    %v712 = vrot.slane %v711, 1
    %v713 = vmax.f32 %v711, %v712
    %v714 = vsel %vm629, %v540, -inf
    %v715 = vrot.slane %v714, 4
    %v716 = vmax.f32 %v714, %v715
    %v717 = vrot.slane %v716, 2
    %v718 = vmax.f32 %v716, %v717
    %v719 = vrot.slane %v718, 1
    %v720 = vmax.f32 %v718, %v719
    %v721 = vsel %vm629, %v548, -inf
    %v722 = vrot.slane %v721, 4
    %v723 = vmax.f32 %v721, %v722
    %v724 = vrot.slane %v723, 2
    %v725 = vmax.f32 %v723, %v724
    %v726 = vrot.slane %v725, 1
    %v727 = vmax.f32 %v725, %v726
    %v728 = vsel %vm629, %v547, -inf
    %v729 = vrot.slane %v728, 4
    %v730 = vmax.f32 %v728, %v729
    %v731 = vrot.slane %v730, 2
    %v732 = vmax.f32 %v730, %v731
    %v733 = vrot.slane %v732, 1
    %v734 = vmax.f32 %v732, %v733
    %v735 = vsel %vm629, %v549, -inf
    %v736 = vrot.slane %v735, 4
    %v737 = vmax.f32 %v735, %v736
    %v738 = vrot.slane %v737, 2
    %v739 = vmax.f32 %v737, %v738
    %v740 = vrot.slane %v739, 1
    %v741 = vmax.f32 %v739, %v740
    %v742 = vsel %vm629, %v557, -inf
    %v743 = vrot.slane %v742, 4
    %v744 = vmax.f32 %v742, %v743
    %v745 = vrot.slane %v744, 2
    %v746 = vmax.f32 %v744, %v745
    %v747 = vrot.slane %v746, 1
    %v748 = vmax.f32 %v746, %v747
    %v749 = vsel %vm629, %v565, -inf
    %v750 = vrot.slane %v749, 4
    %v751 = vmax.f32 %v749, %v750
    %v752 = vrot.slane %v751, 2
    %v753 = vmax.f32 %v751, %v752
    %v754 = vrot.slane %v753, 1
    %v755 = vmax.f32 %v753, %v754
    %v756 = vsel %vm629, %v564, -inf
    %v757 = vrot.slane %v756, 4
    %v758 = vmax.f32 %v756, %v757
    %v759 = vrot.slane %v758, 2
    %v760 = vmax.f32 %v758, %v759
    %v761 = vrot.slane %v760, 1
    %v762 = vmax.f32 %v760, %v761
    %v763 = vsel %vm629, %v566, -inf
    %v764 = vrot.slane %v763, 4
    %v765 = vmax.f32 %v763, %v764
    %v766 = vrot.slane %v765, 2
    %v767 = vmax.f32 %v765, %v766
    %v768 = vrot.slane %v767, 1
    %v769 = vmax.f32 %v767, %v768
    %v770 = vsel %vm629, %v574, -inf
    %v771 = vrot.slane %v770, 4
    %v772 = vmax.f32 %v770, %v771
    %v773 = vrot.slane %v772, 2
    %v774 = vmax.f32 %v772, %v773
    %v775 = vrot.slane %v774, 1
    %v776 = vmax.f32 %v774, %v775
    %v777 = vsel %vm629, %v582, -inf
    %v778 = vrot.slane %v777, 4
    %v779 = vmax.f32 %v777, %v778
    %v780 = vrot.slane %v779, 2
    %v781 = vmax.f32 %v779, %v780
    %v782 = vrot.slane %v781, 1
    %v783 = vmax.f32 %v781, %v782
    %v784 = vsel %vm629, %v581, -inf
    %v785 = vrot.slane %v784, 4
    %v786 = vmax.f32 %v784, %v785
    %v787 = vrot.slane %v786, 2
    %v788 = vmax.f32 %v786, %v787
    %v789 = vrot.slane %v788, 1
    %v790 = vmax.f32 %v788, %v789
    %v791 = vsel %vm629, %v583, -inf
    %v792 = vrot.slane %v791, 4
    %v793 = vmax.f32 %v791, %v792
    %v794 = vrot.slane %v793, 2
    %v795 = vmax.f32 %v793, %v794
    %v796 = vrot.slane %v795, 1
    %v797 = vmax.f32 %v795, %v796
    %v798 = vsel %vm629, %v591, -inf
    %v799 = vrot.slane %v798, 4
    %v800 = vmax.f32 %v798, %v799
    %v801 = vrot.slane %v800, 2
    %v802 = vmax.f32 %v800, %v801
    %v803 = vrot.slane %v802, 1
    %v804 = vmax.f32 %v802, %v803
    %v805 = vsel %vm629, %v599, -inf
    %v806 = vrot.slane %v805, 4
    %v807 = vmax.f32 %v805, %v806
    %v808 = vrot.slane %v807, 2
    %v809 = vmax.f32 %v807, %v808
    %v810 = vrot.slane %v809, 1
    %v811 = vmax.f32 %v809, %v810
    %v812 = vsel %vm629, %v598, -inf
    %v813 = vrot.slane %v812, 4
    %v814 = vmax.f32 %v812, %v813
    %v815 = vrot.slane %v814, 2
    %v816 = vmax.f32 %v814, %v815
    %v817 = vrot.slane %v816, 1
    %v818 = vmax.f32 %v816, %v817
    %v819 = vsel %vm629, %v600, -inf
    %v820 = vrot.slane %v819, 4
    %v821 = vmax.f32 %v819, %v820
    %v822 = vrot.slane %v821, 2
    %v823 = vmax.f32 %v821, %v822
    %v824 = vrot.slane %v823, 1
    %v825 = vmax.f32 %v823, %v824
    %v826 = vmul.f32 %v636, %v473
    %v827 = vmul.f32 %v643, %v473
    %v828 = vmul.f32 %v650, %v473
    %v829 = vmul.f32 %v657, %v473
    %v830 = vmul.f32 %v664, %v473
    %v831 = vmul.f32 %v671, %v473
    %v832 = vmul.f32 %v678, %v473
    %v833 = vmul.f32 %v685, %v473
    %v834 = vmul.f32 %v692, %v473
    %v835 = vmul.f32 %v699, %v473
    %v836 = vmul.f32 %v706, %v473
    %v837 = vmul.f32 %v713, %v473
    %v838 = vmul.f32 %v720, %v473
    %v839 = vmul.f32 %v727, %v473
    %v840 = vmul.f32 %v734, %v473
    %v841 = vmul.f32 %v741, %v473
    %v842 = vmul.f32 %v748, %v473
    %v843 = vmul.f32 %v755, %v473
    %v844 = vmul.f32 %v762, %v473
    %v845 = vmul.f32 %v769, %v473
    %v846 = vmul.f32 %v776, %v473
    %v847 = vmul.f32 %v783, %v473
    %v848 = vmul.f32 %v790, %v473
    %v849 = vmul.f32 %v797, %v473
    %v850 = vmul.f32 %v804, %v473
    %v851 = vmul.f32 %v811, %v473
    %v852 = vmul.f32 %v818, %v473
    %v853 = vmul.f32 %v825, %v473
    %v854 = vsub.f32 %v826, %v474
    %v855 = vsub.f32 %v827, %v474
    %v856 = vsub.f32 %v828, %v474
    %v857 = vsub.f32 %v829, %v474
    %v858 = vsub.f32 %v830, %v474
    %v859 = vsub.f32 %v831, %v474
    %v860 = vsub.f32 %v832, %v474
    %v861 = vsub.f32 %v833, %v474
    %v862 = vsub.f32 %v834, %v474
    %v863 = vsub.f32 %v835, %v474
    %v864 = vsub.f32 %v836, %v474
    %v865 = vsub.f32 %v837, %v474
    %v866 = vsub.f32 %v838, %v474
    %v867 = vsub.f32 %v839, %v474
    %v868 = vsub.f32 %v840, %v474
    %v869 = vsub.f32 %v841, %v474
    %v870 = vsub.f32 %v842, %v474
    %v871 = vsub.f32 %v843, %v474
    %v872 = vsub.f32 %v844, %v474
    %v873 = vsub.f32 %v845, %v474
    %v874 = vsub.f32 %v846, %v474
    %v875 = vsub.f32 %v847, %v474
    %v876 = vsub.f32 %v848, %v474
    %v877 = vsub.f32 %v849, %v474
    %v878 = vsub.f32 %v850, %v474
    %v879 = vsub.f32 %v851, %v474
    %v880 = vsub.f32 %v852, %v474
    %v881 = vsub.f32 %v853, %v474
    %v902 = vrot.slane %v855, 7
    %vm903 = vcmask 1041409
    %v904 = vsel %vm903, %v902, %v854
    %v905 = vrot.slane %v856, 6
    %vm906 = vcmask 1042434
    %v907 = vsel %vm906, %v905, %v904
    %v908 = vrot.slane %v857, 5
    %vm909 = vcmask 1043459
    %v910 = vsel %vm909, %v908, %v907
    %v911 = vrot.slane %v858, 4
    %vm912 = vcmask 1044484
    %v913 = vsel %vm912, %v911, %v910
    %v914 = vrot.slane %v859, 3
    %vm915 = vcmask 1045509
    %v916 = vsel %vm915, %v914, %v913
    %v917 = vrot.slane %v860, 2
    %vm918 = vcmask 1046534
    %v919 = vsel %vm918, %v917, %v916
    %v920 = vrot.slane %v861, 1
    %vm921 = vcmask 1047559
    %v922 = vsel %vm921, %v920, %v919
    %v923 = vrot.slane %v863, 7
    %v924 = vsel %vm903, %v923, %v862
    %v925 = vrot.slane %v869, 7
    %v926 = vsel %vm903, %v925, %v868
    %v927 = vrot.slane %v870, 6
    %v928 = vsel %vm906, %v927, %v926
    %v929 = vrot.slane %v871, 5
    %v930 = vsel %vm909, %v929, %v928
    %v931 = vrot.slane %v872, 4
    %v932 = vsel %vm912, %v931, %v930
    %v933 = vrot.slane %v873, 3
    %v934 = vsel %vm915, %v933, %v932
    %v935 = vrot.slane %v874, 2
    %v936 = vsel %vm918, %v935, %v934
    %v937 = vrot.slane %v875, 1
    %v938 = vsel %vm921, %v937, %v936
    %v939 = vrot.slane %v877, 7
    %v940 = vsel %vm903, %v939, %v876
    %v947 = vrot.slane %v856, 7
    %v948 = vsel %vm903, %v947, %v855
    %v949 = vrot.slane %v857, 6
    %v950 = vsel %vm906, %v949, %v948
    %v951 = vrot.slane %v858, 5
    %v952 = vsel %vm909, %v951, %v950
    %v953 = vrot.slane %v859, 4
    %v954 = vsel %vm912, %v953, %v952
    %v955 = vrot.slane %v860, 3
    %v956 = vsel %vm915, %v955, %v954
    %v957 = vrot.slane %v861, 2
    %v958 = vsel %vm918, %v957, %v956
    %v959 = vrot.slane %v862, 1
    %v960 = vsel %vm921, %v959, %v958
    %v961 = vrot.slane %v864, 7
    %v962 = vsel %vm903, %v961, %v863
    %v963 = vrot.slane %v870, 7
    %v964 = vsel %vm903, %v963, %v869
    %v965 = vrot.slane %v871, 6
    %v966 = vsel %vm906, %v965, %v964
    %v967 = vrot.slane %v872, 5
    %v968 = vsel %vm909, %v967, %v966
    %v969 = vrot.slane %v873, 4
    %v970 = vsel %vm912, %v969, %v968
    %v971 = vrot.slane %v874, 3
    %v972 = vsel %vm915, %v971, %v970
    %v973 = vrot.slane %v875, 2
    %v974 = vsel %vm918, %v973, %v972
    %v975 = vrot.slane %v876, 1
    %v976 = vsel %vm921, %v975, %v974
    %v977 = vrot.slane %v878, 7
    %v978 = vsel %vm903, %v977, %v877
    %979 = vrot.lane.b32.xlu0 %v960, 32
    %v980 = vpop.permute.xlu0 %979
    %981 = vrot.lane.b32.xlu0 %v962, 32
    %v982 = vpop.permute.xlu0 %981
    %983 = vrot.lane.b32.xlu0 %v976, 32
    %v984 = vpop.permute.xlu0 %983
    %985 = vrot.lane.b32.xlu0 %v978, 32
    %v986 = vpop.permute.xlu0 %985
    %v993 = vrot.slane %v857, 7
    %v994 = vsel %vm903, %v993, %v856
    %v995 = vrot.slane %v858, 6
    %v996 = vsel %vm906, %v995, %v994
    %v997 = vrot.slane %v859, 5
    %v998 = vsel %vm909, %v997, %v996
    %v999 = vrot.slane %v860, 4
    %v1000 = vsel %vm912, %v999, %v998
    %v1001 = vrot.slane %v861, 3
    %v1002 = vsel %vm915, %v1001, %v1000
    %v1003 = vrot.slane %v862, 2
    %v1004 = vsel %vm918, %v1003, %v1002
    %v1005 = vrot.slane %v863, 1
    %v1006 = vsel %vm921, %v1005, %v1004
    %v1007 = vrot.slane %v865, 7
    %v1008 = vsel %vm903, %v1007, %v864
    %v1009 = vrot.slane %v871, 7
    %v1010 = vsel %vm903, %v1009, %v870
    %v1011 = vrot.slane %v872, 6
    %v1012 = vsel %vm906, %v1011, %v1010
    %v1013 = vrot.slane %v873, 5
    %v1014 = vsel %vm909, %v1013, %v1012
    %v1015 = vrot.slane %v874, 4
    %v1016 = vsel %vm912, %v1015, %v1014
    %v1017 = vrot.slane %v875, 3
    %v1018 = vsel %vm915, %v1017, %v1016
    %v1019 = vrot.slane %v876, 2
    %v1020 = vsel %vm918, %v1019, %v1018
    %v1021 = vrot.slane %v877, 1
    %v1022 = vsel %vm921, %v1021, %v1020
    %v1023 = vrot.slane %v879, 7
    %v1024 = vsel %vm903, %v1023, %v878
    %1025 = vrot.lane.b32.xlu0 %v1006, 64
    %v1026 = vpop.permute.xlu0 %1025
    %1027 = vrot.lane.b32.xlu0 %v1008, 64
    %v1028 = vpop.permute.xlu0 %1027
    %1029 = vrot.lane.b32.xlu0 %v1022, 64
    %v1030 = vpop.permute.xlu0 %1029
    %1031 = vrot.lane.b32.xlu0 %v1024, 64
    %v1032 = vpop.permute.xlu0 %1031
    %v1039 = vrot.slane %v858, 7
    %v1040 = vsel %vm903, %v1039, %v857
    %v1041 = vrot.slane %v859, 6
    %v1042 = vsel %vm906, %v1041, %v1040
    %v1043 = vrot.slane %v860, 5
    %v1044 = vsel %vm909, %v1043, %v1042
    %v1045 = vrot.slane %v861, 4
    %v1046 = vsel %vm912, %v1045, %v1044
    %v1047 = vrot.slane %v862, 3
    %v1048 = vsel %vm915, %v1047, %v1046
    %v1049 = vrot.slane %v863, 2
    %v1050 = vsel %vm918, %v1049, %v1048
    %v1051 = vrot.slane %v864, 1
    %v1052 = vsel %vm921, %v1051, %v1050
    %v1053 = vrot.slane %v866, 7
    %v1054 = vsel %vm903, %v1053, %v865
    %v1055 = vrot.slane %v872, 7
    %v1056 = vsel %vm903, %v1055, %v871
    %v1057 = vrot.slane %v873, 6
    %v1058 = vsel %vm906, %v1057, %v1056
    %v1059 = vrot.slane %v874, 5
    %v1060 = vsel %vm909, %v1059, %v1058
    %v1061 = vrot.slane %v875, 4
    %v1062 = vsel %vm912, %v1061, %v1060
    %v1063 = vrot.slane %v876, 3
    %v1064 = vsel %vm915, %v1063, %v1062
    %v1065 = vrot.slane %v877, 2
    %v1066 = vsel %vm918, %v1065, %v1064
    %v1067 = vrot.slane %v878, 1
    %v1068 = vsel %vm921, %v1067, %v1066
    %v1069 = vrot.slane %v880, 7
    %v1070 = vsel %vm903, %v1069, %v879
    %1071 = vrot.lane.b32.xlu0 %v1052, 96
    %v1072 = vpop.permute.xlu0 %1071
    %1073 = vrot.lane.b32.xlu0 %v1054, 96
    %v1074 = vpop.permute.xlu0 %1073
    %1075 = vrot.lane.b32.xlu0 %v1068, 96
    %v1076 = vpop.permute.xlu0 %1075
    %1077 = vrot.lane.b32.xlu0 %v1070, 96
    %v1078 = vpop.permute.xlu0 %1077
    %v1085 = vrot.slane %v859, 7
    %v1086 = vsel %vm903, %v1085, %v858
    %v1087 = vrot.slane %v860, 6
    %v1088 = vsel %vm906, %v1087, %v1086
    %v1089 = vrot.slane %v861, 5
    %v1090 = vsel %vm909, %v1089, %v1088
    %v1091 = vrot.slane %v862, 4
    %v1092 = vsel %vm912, %v1091, %v1090
    %v1093 = vrot.slane %v863, 3
    %v1094 = vsel %vm915, %v1093, %v1092
    %v1095 = vrot.slane %v864, 2
    %v1096 = vsel %vm918, %v1095, %v1094
    %v1097 = vrot.slane %v865, 1
    %v1098 = vsel %vm921, %v1097, %v1096
    %v1099 = vrot.slane %v867, 7
    %v1100 = vsel %vm903, %v1099, %v866
    %v1101 = vrot.slane %v873, 7
    %v1102 = vsel %vm903, %v1101, %v872
    %v1103 = vrot.slane %v874, 6
    %v1104 = vsel %vm906, %v1103, %v1102
    %v1105 = vrot.slane %v875, 5
    %v1106 = vsel %vm909, %v1105, %v1104
    %v1107 = vrot.slane %v876, 4
    %v1108 = vsel %vm912, %v1107, %v1106
    %v1109 = vrot.slane %v877, 3
    %v1110 = vsel %vm915, %v1109, %v1108
    %v1111 = vrot.slane %v878, 2
    %v1112 = vsel %vm918, %v1111, %v1110
    %v1113 = vrot.slane %v879, 1
    %v1114 = vsel %vm921, %v1113, %v1112
    %v1115 = vrot.slane %v881, 7
    %v1116 = vsel %vm903, %v1115, %v880
    %v1117 = vsel %vm417, %v922, %v980
    %v1118 = vsel %vm417, %v924, %v982
    %v1119 = vsel %vm417, %v938, %v984
    %v1120 = vsel %vm417, %v940, %v986
    %vm1121 = vcmask 523264
    %v1122 = vsel %vm1121, %v1117, %v1026
    %v1123 = vsel %vm1121, %v1118, %v1028
    %v1124 = vsel %vm1121, %v1119, %v1030
    %v1125 = vsel %vm1121, %v1120, %v1032
    %vm1126 = vcmask 785408
    %v1127 = vsel %vm1126, %v1122, %v1072
    %v1128 = vsel %vm1126, %v1123, %v1074
    %v1129 = vsel %vm1126, %v1124, %v1076
    %v1130 = vsel %vm1126, %v1125, %v1078
    %v1135 = vcombine.low %v1127, %v1098
    %v1136 = vcombine.high %v1127, %v1098
    %v1138 = vunpack.c.l.s4 1983009808
    %v1139 = vunpack.c.0.s8 %v1138
    %v1140 = vlaneseq
    %v1141 = vshrl.u32 %v1140, 7
    %v1142 = vsub.s32 %v1139, %v1141
    %v1143 = vrot.slane %v1135, %v1142
    %v1145 = vunpack.c.l.s4 1983009808
    %v1146 = vunpack.c.0.s8 %v1145
    %v1147 = vlaneseq
    %v1148 = vshrl.u32 %v1147, 7
    %v1149 = vsub.s32 %v1146, %v1148
    %v1150 = vrot.slane %v1136, %v1149
    %v1151 = vcombine.high %v1143, %v1143
    %v1152 = vcombine.high %v1150, %v1150
    %v1153 = vcombine.low %v1128, %v1100
    %v1155 = vunpack.c.l.s4 1983009808
    %v1156 = vunpack.c.0.s8 %v1155
    %v1157 = vlaneseq
    %v1158 = vshrl.u32 %v1157, 7
    %v1159 = vsub.s32 %v1156, %v1158
    %v1160 = vrot.slane %v1153, %v1159
    %v1161 = vcombine.low %v1129, %v1114
    %v1162 = vcombine.high %v1129, %v1114
    %v1164 = vunpack.c.l.s4 1983009808
    %v1165 = vunpack.c.0.s8 %v1164
    %v1166 = vlaneseq
    %v1167 = vshrl.u32 %v1166, 7
    %v1168 = vsub.s32 %v1165, %v1167
    %v1169 = vrot.slane %v1161, %v1168
    %v1171 = vunpack.c.l.s4 1983009808
    %v1172 = vunpack.c.0.s8 %v1171
    %v1173 = vlaneseq
    %v1174 = vshrl.u32 %v1173, 7
    %v1175 = vsub.s32 %v1172, %v1174
    %v1176 = vrot.slane %v1162, %v1175
    %v1177 = vcombine.high %v1169, %v1169
    %v1178 = vcombine.high %v1176, %v1176
    %v1179 = vcombine.low %v1130, %v1116
    %v1181 = vunpack.c.l.s4 1983009808
    %v1182 = vunpack.c.0.s8 %v1181
    %v1183 = vlaneseq
    %v1184 = vshrl.u32 %v1183, 7
    %v1185 = vsub.s32 %v1182, %v1184
    %v1186 = vrot.slane %v1179, %v1185
    %v1188 = vlaneseq
    %v1189 = vshrl.u32 %v1188, 7
    %v1190 = vsub.s32 0, %v1189
    %v1191 = vrot.slane %v51, %v1190
    %v1193 = vcombine.low %v1143, %v1151
    %v1194 = vcombine.low %v1150, %v1152
    %v1196 = vunpack.c.l.s4 1983009808
    %v1197 = vunpack.c.0.s8 %v1196
    %v1198 = vlaneseq
    %v1199 = vshrl.u32 %v1198, 7
    %v1200 = vsub.s32 %v1197, %v1199
    %v1201 = vrot.slane %v1193, %v1200
    %v1203 = vunpack.c.l.s4 1983009808
    %v1204 = vunpack.c.0.s8 %v1203
    %v1205 = vlaneseq
    %v1206 = vshrl.u32 %v1205, 7
    %v1207 = vsub.s32 %v1204, %v1206
    %v1208 = vrot.slane %v1194, %v1207
    %v1209 = vcombine.low %v1201, %v1208
    %v1210 = vcombine.high %v1201, %v1208
    %v1211 = vcombine.low %v1160, %v1169
    %v1212 = vcombine.low %v1177, %v1176
    %v1214 = vunpack.c.l.s4 1983009808
    %v1215 = vunpack.c.0.s8 %v1214
    %v1216 = vlaneseq
    %v1217 = vshrl.u32 %v1216, 7
    %v1218 = vsub.s32 %v1215, %v1217
    %v1219 = vrot.slane %v1211, %v1218
    %v1221 = vunpack.c.l.s4 1983009808
    %v1222 = vunpack.c.0.s8 %v1221
    %v1223 = vlaneseq
    %v1224 = vshrl.u32 %v1223, 7
    %v1225 = vsub.s32 %v1222, %v1224
    %v1226 = vrot.slane %v1212, %v1225
    %v1227 = vcombine.low %v1219, %v1226
    %v1228 = vcombine.high %v1219, %v1226
    %v1229 = vcombine.low %v1178, %v1186
    %v1231 = vunpack.c.l.s4 1983009808
    %v1232 = vunpack.c.0.s8 %v1231
    %v1233 = vlaneseq
    %v1234 = vshrl.u32 %v1233, 7
    %v1235 = vsub.s32 %v1232, %v1234
    %v1236 = vrot.slane %v1229, %v1235
    %v1237 = vcombine.high %v1236, %v1236
    %v1241 = vsel %vm417, %v1210, 0
    %v1243 = vsel %vm417, %v1228, 0
    %v1245 = vsel %vm417, %v1237, 0
    %1247 = vmatprep.subr.mxu0 0.0
    %1248 = vmatpush1.msra.mxu0 %v31
    %1249 = vmatprep.subr.mxu0 0.0
    %1250 = vmatpush1.msra.mxu0 %v32
    %1251 = vmatprep.subr.mxu0 0.0
    %1252 = vmatpush1.msra.mxu0 %v33
    %1253 = vmatprep.subr.mxu0 0.0
    %1254 = vmatpush1.msra.mxu0 %v34
    %1255 = vmatprep.subr.mxu0 0.0
    %1256 = vmatpush1.msra.mxu0 %v35
    %1257 = vmatprep.subr.mxu0 0.0
    %1258 = vmatpush1.msra.mxu0 %v36
    %1259 = vmatprep.subr.mxu0 0.0
    %1260 = vmatpush1.msra.mxu0 %v37
    %1261 = vmatprep.subr.mxu0 0.0
    %1262 = vmatpush1.msra.mxu0 %v38
    %1263 = vmatprep.subr.mxu0 0.0
    %1264 = vmatpush1.msra.mxu0 %v39
    %1265 = vmatprep.subr.mxu0 0.0
    %1266 = vmatpush1.msra.mxu0 %v40
    %1267 = vmatprep.subr.mxu0 0.0
    %1268 = vmatpush1.msra.mxu0 %v41
    %1269 = vmatprep.subr.mxu0 0.0
    %1270 = vmatpush1.msra.mxu0 %v42
    %1271 = vmatprep.subr.mxu0 0.0
    %1272 = vmatpush1.msra.mxu0 %v43
    %1273 = vmatprep.subr.mxu0 0.0
    %1274 = vmatpush1.msra.mxu0 %v44
    %1275 = vmatprep.subr.mxu0 0.0
    %1276 = vmatpush1.msra.mxu0 %v45
    %1277 = vmatprep.subr.mxu0 0.0
    %1278 = vmatpush1.msra.mxu0 %v46
    %1279 = vmatprep.subr.mxu0 0.0
    %1280 = vmatpush1.msra.mxu0 %v47
    %1281 = vmatprep.subr.mxu0 0.0
    %1282 = vmatpush1.msra.mxu0 %v48
    %1283 = vmatprep.subr.mxu0 0.0
    %1284 = vmatpush1.msra.mxu0 %v49
    %1285 = vmatprep.subr.mxu0 0.0
    %1286 = vmatpush1.msra.mxu0 %v50
    %1287 = vmatprep.subr.mxu0 0.0
    %1288 = vmatpush1.msra.mxu0 0.0
    %1289 = vmatprep.subr.mxu0 0.0
    %1290 = vmatpush1.msra.mxu0 0.0
    %1291 = vmatprep.subr.mxu0 0.0
    %1292 = vmatpush1.msra.mxu0 0.0
    %1293 = vmatprep.subr.mxu0 0.0
    %1294 = vmatpush1.msra.mxu0 0.0
    %1295 = vmatprep.subr.mxu0 0.0
    %1296 = vmatpush1.msra.mxu0 0.0
    %1297 = vmatprep.subr.mxu0 0.0
    %1298 = vmatpush1.msra.mxu0 0.0
    %1299 = vmatprep.subr.mxu0 0.0
    %1300 = vmatpush1.msra.mxu0 0.0
    %1301 = vmatprep.subr.mxu0 0.0
    %1302 = vmatpush1.msra.mxu0 0.0
    %1303 = vmatprep.subr.mxu0 0.0
    %1304 = vmatpush1.msra.mxu0 0.0
    %1305 = vmatprep.subr.mxu0 0.0
    %1306 = vmatpush1.msra.mxu0 0.0
    %1307 = vmatprep.subr.mxu0 0.0
    %1308 = vmatpush1.msra.mxu0 0.0
    %1309 = vmatprep.subr.mxu0 0.0
    %1310 = vmatpush1.msra.mxu0 0.0
    %1311 = vmatprep.mubr.f32.mxu0 %v1241
    %1312 = vmatmul.mubr.f32.gmra.mrb[0].mxu0 %v1209
    %v1313 = vpop.f32.mrb[0].mxu0
    %v1314 = vadd.f32 %v1191, %v1313
    %v1315 = vpop.f32.mrb[0].mxu0
    %1316 = vmatprep.mubr.f32.mxu0 %v1243
    %1317 = vmatmul.mubr.f32.gmra.mrb[0].mxu0 %v1227
    %v1318 = vpop.f32.mrb[0].mxu0
    %v1319 = vadd.f32 %v1191, %v1318
    %v1320 = vpop.f32.mrb[0].mxu0
    %1321 = vmatprep.mubr.f32.mxu0 %v1245
    %1322 = vmatmul.mubr.f32.gmra.mrb[0].mxu0 %v1236
    %v1323 = vpop.f32.mrb[0].mxu0
    %v1324 = vadd.f32 %v1191, %v1323
    %v1325 = vpop.f32.mrb[0].mxu0
    %1326 = vdwg.mxu0
    %v1327 = vmax.f32 %v1314, 0.0
    %v1328 = vmax.f32 %v1319, 0.0
    %v1329 = vmax.f32 %v1324, 0.0
    %v1330 = vsel %vm417, %v1327, 0.0
    %v1331 = vsel %vm417, %v1328, 0.0
    %v1332 = vadd.f32 %v1330, %v1331
    %vm1333 = vcmask 257024
    %v1334 = vsel %vm1333, %v1329, 0.0
    %v1335 = vadd.f32 %v1332, %v1334
    %v1336 = vrot.slane %v1335, 4
    %v1337 = vadd.f32 %v1335, %v1336
    %v1338 = vrot.slane %v1337, 2
    %v1339 = vadd.f32 %v1337, %v1338
    %v1340 = vrot.slane %v1339, 1
    %v1341 = vadd.f32 %v1339, %v1340
    %v1342 = vmul.f32 %v1341, 0.05
    %v1343 = vsub.f32 %v1327, %v1342
    %v1344 = vsub.f32 %v1328, %v1342
    %v1345 = vsub.f32 %v1329, %v1342
    %v1346 = vmul.f32 %v1343, %v1343
    %v1347 = vmul.f32 %v1344, %v1344
    %v1348 = vmul.f32 %v1345, %v1345
    %v1349 = vsel %vm417, %v1346, 0.0
    %v1350 = vsel %vm417, %v1347, 0.0
    %v1351 = vadd.f32 %v1349, %v1350
    %v1352 = vsel %vm1333, %v1348, 0.0
    %v1353 = vadd.f32 %v1351, %v1352
    %v1354 = vrot.slane %v1353, 4
    %v1355 = vadd.f32 %v1353, %v1354
    %v1356 = vrot.slane %v1355, 2
    %v1357 = vadd.f32 %v1355, %v1356
    %v1358 = vrot.slane %v1357, 1
    %v1359 = vadd.f32 %v1357, %v1358
    %v1360 = vmul.f32 %v1359, 0.05
    %v1361 = vadd.f32 %v1360, 1e-05
    %v1362 = vrsqrt.pop %v1361
    %v1363 = vmul.f32 %v1342, %v1362
    %1364 = vxpose.xlu0.b32.start [1/16] %v1362, 128
    %1365 = vxpose.xlu0.b32.cont [2/16] 0.0, 128
    %1366 = vxpose.xlu0.b32.cont [3/16] 0.0, 128
    %1367 = vxpose.xlu0.b32.cont [4/16] 0.0, 128
    %1368 = vxpose.xlu0.b32.cont [5/16] 0.0, 128
    %1369 = vxpose.xlu0.b32.cont [6/16] 0.0, 128
    %1370 = vxpose.xlu0.b32.cont [7/16] 0.0, 128
    %1371 = vxpose.xlu0.b32.cont [8/16] 0.0, 128
    %1372 = vxpose.xlu0.b32.cont [9/16] 0.0, 128
    %1373 = vxpose.xlu0.b32.cont [10/16] 0.0, 128
    %1374 = vxpose.xlu0.b32.cont [11/16] 0.0, 128
    %1375 = vxpose.xlu0.b32.cont [12/16] 0.0, 128
    %1376 = vxpose.xlu0.b32.cont [13/16] 0.0, 128
    %1377 = vxpose.xlu0.b32.cont [14/16] 0.0, 128
    %1378 = vxpose.xlu0.b32.cont [15/16] 0.0, 128
    %1379 = vxpose.xlu0.b32.end [16/16] 0.0, 128
    %v1380 = vpop.trf.xlu0
    %v1381 = vpop.trf.xlu0
    %v1382 = vpop.trf.xlu0
    %v1383 = vpop.trf.xlu0
    %v1384 = vpop.trf.xlu0
    %v1385 = vpop.trf.xlu0
    %v1386 = vpop.trf.xlu0
    %v1387 = vpop.trf.xlu0
    %v1388 = vpop.trf.xlu0
    %v1389 = vpop.trf.xlu0
    %v1390 = vpop.trf.xlu0
    %v1391 = vpop.trf.xlu0
    %v1392 = vpop.trf.xlu0
    %v1393 = vpop.trf.xlu0
    %v1394 = vpop.trf.xlu0
    %v1395 = vpop.trf.xlu0
    %1397 = vset.pattern.permute.xlu0 0
    %1398 = vperm.xlu0 %1397, %v1380
    %v1399 = vpop.permute.xlu0 %1398
    %1402 = vset.pattern.permute.xlu0 0
    %1403 = vperm.xlu0 %1402, %v1381
    %v1404 = vpop.permute.xlu0 %1403
    %1407 = vset.pattern.permute.xlu0 0
    %1408 = vperm.xlu0 %1407, %v1382
    %v1409 = vpop.permute.xlu0 %1408
    %1412 = vset.pattern.permute.xlu0 0
    %1413 = vperm.xlu0 %1412, %v1383
    %v1414 = vpop.permute.xlu0 %1413
    %v1416 = vmul.f32 %v52, %v1399
    %v1417 = vmul.f32 %v53, %v1404
    %v1418 = vmul.f32 %v54, %v1409
    %v1419 = vmul.f32 %v55, %v1414
    %v1421 = vsel %vm417, %v1363, 0
    %1423 = vmatprep.subr.mxu0 0.0
    %1424 = vmatpush1.msra.mxu0 %v52
    %1425 = vmatprep.subr.mxu0 0.0
    %1426 = vmatpush1.msra.mxu0 %v53
    %1427 = vmatprep.subr.mxu0 0.0
    %1428 = vmatpush1.msra.mxu0 %v54
    %1429 = vmatprep.subr.mxu0 0.0
    %1430 = vmatpush1.msra.mxu0 %v55
    %1431 = vmatprep.subr.mxu0 0.0
    %1432 = vmatpush1.msra.mxu0 0.0
    %1433 = vmatprep.subr.mxu0 0.0
    %1434 = vmatpush1.msra.mxu0 0.0
    %1435 = vmatprep.subr.mxu0 0.0
    %1436 = vmatpush1.msra.mxu0 0.0
    %1437 = vmatprep.subr.mxu0 0.0
    %1438 = vmatpush1.msra.mxu0 0.0
    %1439 = vmatprep.subr.mxu0 0.0
    %1440 = vmatpush1.msra.mxu0 0.0
    %1441 = vmatprep.subr.mxu0 0.0
    %1442 = vmatpush1.msra.mxu0 0.0
    %1443 = vmatprep.subr.mxu0 0.0
    %1444 = vmatpush1.msra.mxu0 0.0
    %1445 = vmatprep.subr.mxu0 0.0
    %1446 = vmatpush1.msra.mxu0 0.0
    %1447 = vmatprep.subr.mxu0 0.0
    %1448 = vmatpush1.msra.mxu0 0.0
    %1449 = vmatprep.subr.mxu0 0.0
    %1450 = vmatpush1.msra.mxu0 0.0
    %1451 = vmatprep.subr.mxu0 0.0
    %1452 = vmatpush1.msra.mxu0 0.0
    %1453 = vmatprep.subr.mxu0 0.0
    %1454 = vmatpush1.msra.mxu0 0.0
    %1455 = vmatprep.subr.mxu0 0.0
    %1456 = vmatpush1.msra.mxu0 0.0
    %1457 = vmatprep.subr.mxu0 0.0
    %1458 = vmatpush1.msra.mxu0 0.0
    %1459 = vmatprep.subr.mxu0 0.0
    %1460 = vmatpush1.msra.mxu0 0.0
    %1461 = vmatprep.subr.mxu0 0.0
    %1462 = vmatpush1.msra.mxu0 0.0
    %1463 = vmatprep.subr.mxu0 0.0
    %1464 = vmatpush1.msra.mxu0 0.0
    %1465 = vmatprep.subr.mxu0 0.0
    %1466 = vmatpush1.msra.mxu0 0.0
    %1467 = vmatprep.subr.mxu0 0.0
    %1468 = vmatpush1.msra.mxu0 0.0
    %1469 = vmatprep.subr.mxu0 0.0
    %1470 = vmatpush1.msra.mxu0 0.0
    %1471 = vmatprep.subr.mxu0 0.0
    %1472 = vmatpush1.msra.mxu0 0.0
    %1473 = vmatprep.subr.mxu0 0.0
    %1474 = vmatpush1.msra.mxu0 0.0
    %1475 = vmatprep.subr.mxu0 0.0
    %1476 = vmatpush1.msra.mxu0 0.0
    %1477 = vmatprep.subr.mxu0 0.0
    %1478 = vmatpush1.msra.mxu0 0.0
    %1479 = vmatprep.subr.mxu0 0.0
    %1480 = vmatpush1.msra.mxu0 0.0
    %1481 = vmatprep.subr.mxu0 0.0
    %1482 = vmatpush1.msra.mxu0 0.0
    %1483 = vmatprep.subr.mxu0 0.0
    %1484 = vmatpush1.msra.mxu0 0.0
    %1485 = vmatprep.subr.mxu0 0.0
    %1486 = vmatpush1.msra.mxu0 0.0
    %1487 = vmatprep.mubr.f32.mxu0 0.0
    %1488 = vmatmul.mubr.f32.gmra.mrb[0].mxu0 %v1421
    %v1489 = vpop.f32.mrb[0].mxu0
    %v1490 = vadd.f32 0.0, %v1489
    %v1491 = vpop.f32.mrb[0].mxu0
    %1492 = vdwg.mxu0
    %v1493 = vsub.f32 %v56, %v1490
    %v1495 = vlaneseq
    %v1496 = vshrl.u32 %v1495, 7
    %v1497 = vsub.s32 0, %v1496
    %v1498 = vrot.slane %v1493, %v1497
    %v1501 = vsel %vm417, %v1327, 0
    %v1504 = vsel %vm417, %v1328, 0
    %v1507 = vsel %vm417, %v1329, 0
    %1509 = vmatprep.subr.mxu0 0.0
    %1510 = vmatpush1.msra.mxu0 %v1416
    %1511 = vmatprep.subr.mxu0 0.0
    %1512 = vmatpush1.msra.mxu0 %v1417
    %1513 = vmatprep.subr.mxu0 0.0
    %1514 = vmatpush1.msra.mxu0 %v1418
    %1515 = vmatprep.subr.mxu0 0.0
    %1516 = vmatpush1.msra.mxu0 %v1419
    %1517 = vmatprep.subr.mxu0 0.0
    %1518 = vmatpush1.msra.mxu0 0.0
    %1519 = vmatprep.subr.mxu0 0.0
    %1520 = vmatpush1.msra.mxu0 0.0
    %1521 = vmatprep.subr.mxu0 0.0
    %1522 = vmatpush1.msra.mxu0 0.0
    %1523 = vmatprep.subr.mxu0 0.0
    %1524 = vmatpush1.msra.mxu0 0.0
    %1525 = vmatprep.subr.mxu0 0.0
    %1526 = vmatpush1.msra.mxu0 0.0
    %1527 = vmatprep.subr.mxu0 0.0
    %1528 = vmatpush1.msra.mxu0 0.0
    %1529 = vmatprep.subr.mxu0 0.0
    %1530 = vmatpush1.msra.mxu0 0.0
    %1531 = vmatprep.subr.mxu0 0.0
    %1532 = vmatpush1.msra.mxu0 0.0
    %1533 = vmatprep.subr.mxu0 0.0
    %1534 = vmatpush1.msra.mxu0 0.0
    %1535 = vmatprep.subr.mxu0 0.0
    %1536 = vmatpush1.msra.mxu0 0.0
    %1537 = vmatprep.subr.mxu0 0.0
    %1538 = vmatpush1.msra.mxu0 0.0
    %1539 = vmatprep.subr.mxu0 0.0
    %1540 = vmatpush1.msra.mxu0 0.0
    %1541 = vmatprep.subr.mxu0 0.0
    %1542 = vmatpush1.msra.mxu0 0.0
    %1543 = vmatprep.subr.mxu0 0.0
    %1544 = vmatpush1.msra.mxu0 0.0
    %1545 = vmatprep.subr.mxu0 0.0
    %1546 = vmatpush1.msra.mxu0 0.0
    %1547 = vmatprep.subr.mxu0 0.0
    %1548 = vmatpush1.msra.mxu0 0.0
    %1549 = vmatprep.subr.mxu0 0.0
    %1550 = vmatpush1.msra.mxu0 0.0
    %1551 = vmatprep.subr.mxu0 0.0
    %1552 = vmatpush1.msra.mxu0 0.0
    %1553 = vmatprep.subr.mxu0 0.0
    %1554 = vmatpush1.msra.mxu0 0.0
    %1555 = vmatprep.subr.mxu0 0.0
    %1556 = vmatpush1.msra.mxu0 0.0
    %1557 = vmatprep.subr.mxu0 0.0
    %1558 = vmatpush1.msra.mxu0 0.0
    %1559 = vmatprep.subr.mxu0 0.0
    %1560 = vmatpush1.msra.mxu0 0.0
    %1561 = vmatprep.subr.mxu0 0.0
    %1562 = vmatpush1.msra.mxu0 0.0
    %1563 = vmatprep.subr.mxu0 0.0
    %1564 = vmatpush1.msra.mxu0 0.0
    %1565 = vmatprep.subr.mxu0 0.0
    %1566 = vmatpush1.msra.mxu0 0.0
    %1567 = vmatprep.subr.mxu0 0.0
    %1568 = vmatpush1.msra.mxu0 0.0
    %1569 = vmatprep.subr.mxu0 0.0
    %1570 = vmatpush1.msra.mxu0 0.0
    %1571 = vmatprep.subr.mxu0 0.0
    %1572 = vmatpush1.msra.mxu0 0.0
    %1573 = vmatprep.mubr.f32.mxu0 0.0
    %1574 = vmatmul.mubr.f32.gmra.mrb[0].mxu0 %v1501
    %v1575 = vpop.f32.mrb[0].mxu0
    %v1576 = vadd.f32 %v1498, %v1575
    %v1577 = vpop.f32.mrb[0].mxu0
    %1578 = vmatprep.mubr.f32.mxu0 0.0
    %1579 = vmatmul.mubr.f32.gmra.mrb[0].mxu0 %v1504
    %v1580 = vpop.f32.mrb[0].mxu0
    %v1581 = vadd.f32 %v1498, %v1580
    %v1582 = vpop.f32.mrb[0].mxu0
    %1583 = vmatprep.mubr.f32.mxu0 0.0
    %1584 = vmatmul.mubr.f32.gmra.mrb[0].mxu0 %v1507
    %v1585 = vpop.f32.mrb[0].mxu0
    %v1586 = vadd.f32 %v1498, %v1585
    %v1587 = vpop.f32.mrb[0].mxu0
    %1588 = vdwg.mxu0
    %v1592 = vcombine.high %v1576, %v1576
    %v1594 = vunpack.c.l.s4 1983009808
    %v1595 = vunpack.c.0.s8 %v1594
    %v1596 = vlaneseq
    %v1597 = vshrl.u32 %v1596, 7
    %v1598 = vsub.s32 %v1595, %v1597
    %v1599 = vrot.slane %v1576, %v1598
    %v1601 = vunpack.c.l.s4 1983009808
    %v1602 = vunpack.c.0.s8 %v1601
    %v1603 = vlaneseq
    %v1604 = vshrl.u32 %v1603, 7
    %v1605 = vsub.s32 %v1602, %v1604
    %v1606 = vrot.slane %v1592, %v1605
    %v1607 = vcombine.high %v1599, %v1599
    %v1608 = vcombine.high %v1606, %v1606
    %v1609 = vcombine.high %v1581, %v1581
    %v1611 = vunpack.c.l.s4 1983009808
    %v1612 = vunpack.c.0.s8 %v1611
    %v1613 = vlaneseq
    %v1614 = vshrl.u32 %v1613, 7
    %v1615 = vsub.s32 %v1612, %v1614
    %v1616 = vrot.slane %v1581, %v1615
    %v1618 = vunpack.c.l.s4 1983009808
    %v1619 = vunpack.c.0.s8 %v1618
    %v1620 = vlaneseq
    %v1621 = vshrl.u32 %v1620, 7
    %v1622 = vsub.s32 %v1619, %v1621
    %v1623 = vrot.slane %v1609, %v1622
    %v1624 = vcombine.high %v1616, %v1616
    %v1625 = vcombine.high %v1623, %v1623
    %v1627 = vunpack.c.l.s4 1983009808
    %v1628 = vunpack.c.0.s8 %v1627
    %v1629 = vlaneseq
    %v1630 = vshrl.u32 %v1629, 7
    %v1631 = vsub.s32 %v1628, %v1630
    %v1632 = vrot.slane %v1586, %v1631
    %v1633 = vcombine.high %v1632, %v1632
    %v1644 = vcombine.low %v1599, %v1607
    %v1645 = vcombine.low %v1606, %v1608
    %v1647 = vunpack.c.l.s4 1983009808
    %v1648 = vunpack.c.0.s8 %v1647
    %v1649 = vlaneseq
    %v1650 = vshrl.u32 %v1649, 7
    %v1651 = vsub.s32 %v1648, %v1650
    %v1652 = vrot.slane %v1644, %v1651
    %v1654 = vunpack.c.l.s4 1983009808
    %v1655 = vunpack.c.0.s8 %v1654
    %v1656 = vlaneseq
    %v1657 = vshrl.u32 %v1656, 7
    %v1658 = vsub.s32 %v1655, %v1657
    %v1659 = vrot.slane %v1645, %v1658
    %v1660 = vcombine.low %v1652, %v1659
    %v1662 = vunpack.c.l.s4 1983009808
    %v1663 = vunpack.c.0.s8 %v1662
    %v1664 = vlaneseq
    %v1665 = vshrl.u32 %v1664, 7
    %v1666 = vsub.s32 %v1663, %v1665
    %v1667 = vrot.slane %v1616, %v1666
    %v1668 = vcombine.low %v1624, %v1623
    %v1669 = vcombine.low %v1625, %v1632
    %v1671 = vunpack.c.l.s4 1983009808
    %v1672 = vunpack.c.0.s8 %v1671
    %v1673 = vlaneseq
    %v1674 = vshrl.u32 %v1673, 7
    %v1675 = vsub.s32 %v1672, %v1674
    %v1676 = vrot.slane %v1668, %v1675
    %v1678 = vunpack.c.l.s4 1983009808
    %v1679 = vunpack.c.0.s8 %v1678
    %v1680 = vlaneseq
    %v1681 = vshrl.u32 %v1680, 7
    %v1682 = vsub.s32 %v1679, %v1681
    %v1683 = vrot.slane %v1669, %v1682
    %v1684 = vcombine.low %v1676, %v1683
    %v1686 = vunpack.c.l.s4 1983009808
    %v1687 = vunpack.c.0.s8 %v1686
    %v1688 = vlaneseq
    %v1689 = vshrl.u32 %v1688, 7
    %v1690 = vsub.s32 %v1687, %v1689
    %v1691 = vrot.slane %v1633, %v1690
    %vm1696 = vcmask 72768
    %v1697 = vsel %vm1696, %v1660, -inf
    %vm1698 = vcmask 66624
    %v1699 = vsel %vm1698, %v1667, -inf
    %v1700 = vmax.f32 %v1697, %v1699
    %v1701 = vrot.slane %v1700, 4
    %v1702 = vmax.f32 %v1700, %v1701
    %v1703 = vrot.slane %v1702, 2
    %v1704 = vmax.f32 %v1702, %v1703
    %v1705 = vrot.slane %v1704, 1
    %v1706 = vmax.f32 %v1704, %v1705
    %v1707 = vsel %vm1696, %v1684, -inf
    %v1708 = vsel %vm1698, %v1691, -inf
    %v1709 = vmax.f32 %v1707, %v1708
    %v1710 = vrot.slane %v1709, 4
    %v1711 = vmax.f32 %v1709, %v1710
    %v1712 = vrot.slane %v1711, 2
    %v1713 = vmax.f32 %v1711, %v1712
    %v1714 = vrot.slane %v1713, 1
    %v1715 = vmax.f32 %v1713, %v1714
    %v1718 = vcombine.high %v1706, %v1706
    %v1720 = vunpack.c.l.s4 1983009808
    %v1721 = vunpack.c.0.s8 %v1720
    %v1722 = vlaneseq
    %v1723 = vshrl.u32 %v1722, 7
    %v1724 = vsub.s32 %v1721, %v1723
    %v1725 = vrot.slane %v1706, %v1724
    %v1727 = vunpack.c.l.s4 1983009808
    %v1728 = vunpack.c.0.s8 %v1727
    %v1729 = vlaneseq
    %v1730 = vshrl.u32 %v1729, 7
    %v1731 = vsub.s32 %v1728, %v1730
    %v1732 = vrot.slane %v1718, %v1731
    %v1733 = vcombine.high %v1725, %v1725
    %v1734 = vcombine.high %v1732, %v1732
    %v1735 = vcombine.high %v1715, %v1715
    %v1737 = vunpack.c.l.s4 1983009808
    %v1738 = vunpack.c.0.s8 %v1737
    %v1739 = vlaneseq
    %v1740 = vshrl.u32 %v1739, 7
    %v1741 = vsub.s32 %v1738, %v1740
    %v1742 = vrot.slane %v1715, %v1741
    %v1744 = vunpack.c.l.s4 1983009808
    %v1745 = vunpack.c.0.s8 %v1744
    %v1746 = vlaneseq
    %v1747 = vshrl.u32 %v1746, 7
    %v1748 = vsub.s32 %v1745, %v1747
    %v1749 = vrot.slane %v1735, %v1748
    %v1750 = vcombine.high %v1742, %v1742
    %v1751 = vcombine.high %v1749, %v1749
    %v1760 = vsub.f32 %v1599, %v1725
    %v1761 = vsub.f32 %v1607, %v1733
    %v1762 = vsub.f32 %v1606, %v1732
    %v1763 = vsub.f32 %v1608, %v1734
    %v1764 = vsub.f32 %v1616, %v1725
    %v1765 = vsub.f32 %v1624, %v1742
    %v1766 = vsub.f32 %v1623, %v1750
    %v1767 = vsub.f32 %v1625, %v1749
    %v1768 = vsub.f32 %v1632, %v1751
    %v1769 = vsub.f32 %v1633, %v1742
    %v1770 = vmul.f32 %v1760, 1.442695
    %v1771 = vpow.pop %v1770
    %v1772 = vmul.f32 %v1761, 1.442695
    %v1773 = vpow.pop %v1772
    %v1774 = vmul.f32 %v1762, 1.442695
    %v1775 = vpow.pop %v1774
    %v1776 = vmul.f32 %v1763, 1.442695
    %v1777 = vpow.pop %v1776
    %v1778 = vmul.f32 %v1764, 1.442695
    %v1779 = vpow.pop %v1778
    %v1780 = vmul.f32 %v1765, 1.442695
    %v1781 = vpow.pop %v1780
    %v1782 = vmul.f32 %v1766, 1.442695
    %v1783 = vpow.pop %v1782
    %v1784 = vmul.f32 %v1767, 1.442695
    %v1785 = vpow.pop %v1784
    %v1786 = vmul.f32 %v1768, 1.442695
    %v1787 = vpow.pop %v1786
    %v1788 = vmul.f32 %v1769, 1.442695
    %v1789 = vpow.pop %v1788
    %v1800 = vcombine.low %v1771, %v1773
    %v1801 = vcombine.low %v1775, %v1777
    %v1803 = vunpack.c.l.s4 1983009808
    %v1804 = vunpack.c.0.s8 %v1803
    %v1805 = vlaneseq
    %v1806 = vshrl.u32 %v1805, 7
    %v1807 = vsub.s32 %v1804, %v1806
    %v1808 = vrot.slane %v1800, %v1807
    %v1810 = vunpack.c.l.s4 1983009808
    %v1811 = vunpack.c.0.s8 %v1810
    %v1812 = vlaneseq
    %v1813 = vshrl.u32 %v1812, 7
    %v1814 = vsub.s32 %v1811, %v1813
    %v1815 = vrot.slane %v1801, %v1814
    %v1816 = vcombine.low %v1808, %v1815
    %v1818 = vunpack.c.l.s4 1983009808
    %v1819 = vunpack.c.0.s8 %v1818
    %v1820 = vlaneseq
    %v1821 = vshrl.u32 %v1820, 7
    %v1822 = vsub.s32 %v1819, %v1821
    %v1823 = vrot.slane %v1779, %v1822
    %v1824 = vcombine.low %v1781, %v1783
    %v1825 = vcombine.low %v1785, %v1787
    %v1827 = vunpack.c.l.s4 1983009808
    %v1828 = vunpack.c.0.s8 %v1827
    %v1829 = vlaneseq
    %v1830 = vshrl.u32 %v1829, 7
    %v1831 = vsub.s32 %v1828, %v1830
    %v1832 = vrot.slane %v1824, %v1831
    %v1834 = vunpack.c.l.s4 1983009808
    %v1835 = vunpack.c.0.s8 %v1834
    %v1836 = vlaneseq
    %v1837 = vshrl.u32 %v1836, 7
    %v1838 = vsub.s32 %v1835, %v1837
    %v1839 = vrot.slane %v1825, %v1838
    %v1840 = vcombine.low %v1832, %v1839
    %v1842 = vunpack.c.l.s4 1983009808
    %v1843 = vunpack.c.0.s8 %v1842
    %v1844 = vlaneseq
    %v1845 = vshrl.u32 %v1844, 7
    %v1846 = vsub.s32 %v1843, %v1845
    %v1847 = vrot.slane %v1789, %v1846
    %v1852 = vsel %vm1696, %v1816, 0.0
    %v1853 = vsel %vm1698, %v1823, 0.0
    %v1854 = vadd.f32 %v1852, %v1853
    %v1855 = vrot.slane %v1854, 4
    %v1856 = vadd.f32 %v1854, %v1855
    %v1857 = vrot.slane %v1856, 2
    %v1858 = vadd.f32 %v1856, %v1857
    %v1859 = vrot.slane %v1858, 1
    %v1860 = vadd.f32 %v1858, %v1859
    %v1861 = vsel %vm1696, %v1840, 0.0
    %v1862 = vsel %vm1698, %v1847, 0.0
    %v1863 = vadd.f32 %v1861, %v1862
    %v1864 = vrot.slane %v1863, 4
    %v1865 = vadd.f32 %v1863, %v1864
    %v1866 = vrot.slane %v1865, 2
    %v1867 = vadd.f32 %v1865, %v1866
    %v1868 = vrot.slane %v1867, 1
    %v1869 = vadd.f32 %v1867, %v1868
    %v1872 = vcombine.high %v1860, %v1860
    %v1874 = vunpack.c.l.s4 1983009808
    %v1875 = vunpack.c.0.s8 %v1874
    %v1876 = vlaneseq
    %v1877 = vshrl.u32 %v1876, 7
    %v1878 = vsub.s32 %v1875, %v1877
    %v1879 = vrot.slane %v1860, %v1878
    %v1881 = vunpack.c.l.s4 1983009808
    %v1882 = vunpack.c.0.s8 %v1881
    %v1883 = vlaneseq
    %v1884 = vshrl.u32 %v1883, 7
    %v1885 = vsub.s32 %v1882, %v1884
    %v1886 = vrot.slane %v1872, %v1885
    %v1887 = vcombine.high %v1879, %v1879
    %v1888 = vcombine.high %v1886, %v1886
    %v1889 = vcombine.high %v1869, %v1869
    %v1891 = vunpack.c.l.s4 1983009808
    %v1892 = vunpack.c.0.s8 %v1891
    %v1893 = vlaneseq
    %v1894 = vshrl.u32 %v1893, 7
    %v1895 = vsub.s32 %v1892, %v1894
    %v1896 = vrot.slane %v1869, %v1895
    %v1898 = vunpack.c.l.s4 1983009808
    %v1899 = vunpack.c.0.s8 %v1898
    %v1900 = vlaneseq
    %v1901 = vshrl.u32 %v1900, 7
    %v1902 = vsub.s32 %v1899, %v1901
    %v1903 = vrot.slane %v1889, %v1902
    %v1904 = vcombine.high %v1896, %v1896
    %v1905 = vcombine.high %v1903, %v1903
    %v1914 = vrcp.pop %v1879
    %v1915 = vmul.f32 %v1771, %v1914
    %v1916 = vrcp.pop %v1887
    %v1917 = vmul.f32 %v1773, %v1916
    %v1918 = vrcp.pop %v1886
    %v1919 = vmul.f32 %v1775, %v1918
    %v1920 = vrcp.pop %v1888
    %v1921 = vmul.f32 %v1777, %v1920
    %v1922 = vmul.f32 %v1779, %v1914
    %v1923 = vrcp.pop %v1896
    %v1924 = vmul.f32 %v1781, %v1923
    %v1925 = vrcp.pop %v1904
    %v1926 = vmul.f32 %v1783, %v1925
    %v1927 = vrcp.pop %v1903
    %v1928 = vmul.f32 %v1785, %v1927
    %v1929 = vrcp.pop %v1905
    %v1930 = vmul.f32 %v1787, %v1929
    %v1931 = vmul.f32 %v1789, %v1923
    %v1942 = vcombine.low %v1915, %v1917
    %v1943 = vcombine.low %v1919, %v1921
    %v1945 = vunpack.c.l.s4 1983009808
    %v1946 = vunpack.c.0.s8 %v1945
    %v1947 = vlaneseq
    %v1948 = vshrl.u32 %v1947, 7
    %v1949 = vsub.s32 %v1946, %v1948
    %v1950 = vrot.slane %v1942, %v1949
    %v1952 = vunpack.c.l.s4 1983009808
    %v1953 = vunpack.c.0.s8 %v1952
    %v1954 = vlaneseq
    %v1955 = vshrl.u32 %v1954, 7
    %v1956 = vsub.s32 %v1953, %v1955
    %v1957 = vrot.slane %v1943, %v1956
    %v1958 = vcombine.low %v1950, %v1957
    %v1960 = vunpack.c.l.s4 1983009808
    %v1961 = vunpack.c.0.s8 %v1960
    %v1962 = vlaneseq
    %v1963 = vshrl.u32 %v1962, 7
    %v1964 = vsub.s32 %v1961, %v1963
    %v1965 = vrot.slane %v1922, %v1964
    %v1966 = vcombine.low %v1924, %v1926
    %v1967 = vcombine.low %v1928, %v1930
    %v1969 = vunpack.c.l.s4 1983009808
    %v1970 = vunpack.c.0.s8 %v1969
    %v1971 = vlaneseq
    %v1972 = vshrl.u32 %v1971, 7
    %v1973 = vsub.s32 %v1970, %v1972
    %v1974 = vrot.slane %v1966, %v1973
    %v1976 = vunpack.c.l.s4 1983009808
    %v1977 = vunpack.c.0.s8 %v1976
    %v1978 = vlaneseq
    %v1979 = vshrl.u32 %v1978, 7
    %v1980 = vsub.s32 %v1977, %v1979
    %v1981 = vrot.slane %v1967, %v1980
    %v1982 = vcombine.low %v1974, %v1981
    %v1984 = vunpack.c.l.s4 1983009808
    %v1985 = vunpack.c.0.s8 %v1984
    %v1986 = vlaneseq
    %v1987 = vshrl.u32 %v1986, 7
    %v1988 = vsub.s32 %v1985, %v1987
    %v1989 = vrot.slane %v1931, %v1988
    %1990 = vrot.lane.b32.xlu0 %v1958, 120
    %v1991 = vpop.permute.xlu0 %1990
    %1992 = vrot.lane.b32.xlu0 %v1965, 120
    %v1993 = vpop.permute.xlu0 %1992
    %1994 = vrot.lane.b32.xlu0 %v1982, 120
    %v1995 = vpop.permute.xlu0 %1994
    %1996 = vrot.lane.b32.xlu0 %v1989, 120
    %v1997 = vpop.permute.xlu0 %1996
    %2002 = vxpose.xlu0.b32.start [1/16] %v1991, 128
    %2003 = vxpose.xlu0.b32.cont [2/16] %v1993, 128
    %2004 = vxpose.xlu0.b32.cont [3/16] 0.0, 128
    %2005 = vxpose.xlu0.b32.cont [4/16] 0.0, 128
    %2006 = vxpose.xlu0.b32.cont [5/16] 0.0, 128
    %2007 = vxpose.xlu0.b32.cont [6/16] 0.0, 128
    %2008 = vxpose.xlu0.b32.cont [7/16] 0.0, 128
    %2009 = vxpose.xlu0.b32.cont [8/16] 0.0, 128
    %2010 = vxpose.xlu0.b32.cont [9/16] 0.0, 128
    %2011 = vxpose.xlu0.b32.cont [10/16] 0.0, 128
    %2012 = vxpose.xlu0.b32.cont [11/16] 0.0, 128
    %2013 = vxpose.xlu0.b32.cont [12/16] 0.0, 128
    %2014 = vxpose.xlu0.b32.cont [13/16] 0.0, 128
    %2015 = vxpose.xlu0.b32.cont [14/16] 0.0, 128
    %2016 = vxpose.xlu0.b32.cont [15/16] 0.0, 128
    %2017 = vxpose.xlu0.b32.end [16/16] 0.0, 128
    %v2018 = vpop.trf.xlu0
    %v2019 = vpop.trf.xlu0
    %v2020 = vpop.trf.xlu0
    %v2021 = vpop.trf.xlu0
    %v2022 = vpop.trf.xlu0
    %v2023 = vpop.trf.xlu0
    %v2024 = vpop.trf.xlu0
    %v2025 = vpop.trf.xlu0
    %v2026 = vpop.trf.xlu0
    %v2027 = vpop.trf.xlu0
    %v2028 = vpop.trf.xlu0
    %v2029 = vpop.trf.xlu0
    %v2030 = vpop.trf.xlu0
    %v2031 = vpop.trf.xlu0
    %v2032 = vpop.trf.xlu0
    %v2033 = vpop.trf.xlu0
    %2034 = vxpose.xlu0.b32.start [1/16] %v1995, 128
    %2035 = vxpose.xlu0.b32.cont [2/16] %v1997, 128
    %2036 = vxpose.xlu0.b32.cont [3/16] 0.0, 128
    %2037 = vxpose.xlu0.b32.cont [4/16] 0.0, 128
    %2038 = vxpose.xlu0.b32.cont [5/16] 0.0, 128
    %2039 = vxpose.xlu0.b32.cont [6/16] 0.0, 128
    %2040 = vxpose.xlu0.b32.cont [7/16] 0.0, 128
    %2041 = vxpose.xlu0.b32.cont [8/16] 0.0, 128
    %2042 = vxpose.xlu0.b32.cont [9/16] 0.0, 128
    %2043 = vxpose.xlu0.b32.cont [10/16] 0.0, 128
    %2044 = vxpose.xlu0.b32.cont [11/16] 0.0, 128
    %2045 = vxpose.xlu0.b32.cont [12/16] 0.0, 128
    %2046 = vxpose.xlu0.b32.cont [13/16] 0.0, 128
    %2047 = vxpose.xlu0.b32.cont [14/16] 0.0, 128
    %2048 = vxpose.xlu0.b32.cont [15/16] 0.0, 128
    %2049 = vxpose.xlu0.b32.end [16/16] 0.0, 128
    %v2050 = vpop.trf.xlu0
    %v2051 = vpop.trf.xlu0
    %v2052 = vpop.trf.xlu0
    %v2053 = vpop.trf.xlu0
    %v2054 = vpop.trf.xlu0
    %v2055 = vpop.trf.xlu0
    %v2056 = vpop.trf.xlu0
    %v2057 = vpop.trf.xlu0
    %v2058 = vpop.trf.xlu0
    %v2059 = vpop.trf.xlu0
    %v2060 = vpop.trf.xlu0
    %v2061 = vpop.trf.xlu0
    %v2062 = vpop.trf.xlu0
    %v2063 = vpop.trf.xlu0
    %v2064 = vpop.trf.xlu0
    %v2065 = vpop.trf.xlu0
    %vm2066 = vcmask 80896
    %v2068 = vsel %vm2066, %v2018, 0
    %vm2070 = vcmask 1041408
    %v2071 = vsel %vm2070, %v1667, 0
    %2073 = vmatprep.subr.mxu0 0.0
    %2074 = vmatpush1.msra.mxu0 %v1660
    %2075 = vmatprep.subr.mxu0 0.0
    %2076 = vmatpush1.msra.mxu0 %v2071
    %2077 = vmatprep.subr.mxu0 0.0
    %2078 = vmatpush1.msra.mxu0 0.0
    %2079 = vmatprep.subr.mxu0 0.0
    %2080 = vmatpush1.msra.mxu0 0.0
    %2081 = vmatprep.subr.mxu0 0.0
    %2082 = vmatpush1.msra.mxu0 0.0
    %2083 = vmatprep.subr.mxu0 0.0
    %2084 = vmatpush1.msra.mxu0 0.0
    %2085 = vmatprep.subr.mxu0 0.0
    %2086 = vmatpush1.msra.mxu0 0.0
    %2087 = vmatprep.subr.mxu0 0.0
    %2088 = vmatpush1.msra.mxu0 0.0
    %2089 = vmatprep.subr.mxu0 0.0
    %2090 = vmatpush1.msra.mxu0 0.0
    %2091 = vmatprep.subr.mxu0 0.0
    %2092 = vmatpush1.msra.mxu0 0.0
    %2093 = vmatprep.subr.mxu0 0.0
    %2094 = vmatpush1.msra.mxu0 0.0
    %2095 = vmatprep.subr.mxu0 0.0
    %2096 = vmatpush1.msra.mxu0 0.0
    %2097 = vmatprep.subr.mxu0 0.0
    %2098 = vmatpush1.msra.mxu0 0.0
    %2099 = vmatprep.subr.mxu0 0.0
    %2100 = vmatpush1.msra.mxu0 0.0
    %2101 = vmatprep.subr.mxu0 0.0
    %2102 = vmatpush1.msra.mxu0 0.0
    %2103 = vmatprep.subr.mxu0 0.0
    %2104 = vmatpush1.msra.mxu0 0.0
    %2105 = vmatprep.subr.mxu0 0.0
    %2106 = vmatpush1.msra.mxu0 0.0
    %2107 = vmatprep.subr.mxu0 0.0
    %2108 = vmatpush1.msra.mxu0 0.0
    %2109 = vmatprep.subr.mxu0 0.0
    %2110 = vmatpush1.msra.mxu0 0.0
    %2111 = vmatprep.subr.mxu0 0.0
    %2112 = vmatpush1.msra.mxu0 0.0
    %2113 = vmatprep.subr.mxu0 0.0
    %2114 = vmatpush1.msra.mxu0 0.0
    %2115 = vmatprep.subr.mxu0 0.0
    %2116 = vmatpush1.msra.mxu0 0.0
    %2117 = vmatprep.subr.mxu0 0.0
    %2118 = vmatpush1.msra.mxu0 0.0
    %2119 = vmatprep.subr.mxu0 0.0
    %2120 = vmatpush1.msra.mxu0 0.0
    %2121 = vmatprep.subr.mxu0 0.0
    %2122 = vmatpush1.msra.mxu0 0.0
    %2123 = vmatprep.subr.mxu0 0.0
    %2124 = vmatpush1.msra.mxu0 0.0
    %2125 = vmatprep.subr.mxu0 0.0
    %2126 = vmatpush1.msra.mxu0 0.0
    %2127 = vmatprep.subr.mxu0 0.0
    %2128 = vmatpush1.msra.mxu0 0.0
    %2129 = vmatprep.subr.mxu0 0.0
    %2130 = vmatpush1.msra.mxu0 0.0
    %2131 = vmatprep.subr.mxu0 0.0
    %2132 = vmatpush1.msra.mxu0 0.0
    %2133 = vmatprep.subr.mxu0 0.0
    %2134 = vmatpush1.msra.mxu0 0.0
    %2135 = vmatprep.subr.mxu0 0.0
    %2136 = vmatpush1.msra.mxu0 0.0
    %2137 = vmatprep.mubr.f32.mxu0 0.0
    %2138 = vmatmul.mubr.f32.gmra.mrb[0].mxu0 %v2068
    %v2139 = vpop.f32.mrb[0].mxu0
    %v2140 = vadd.f32 0.0, %v2139
    %v2141 = vpop.f32.mrb[0].mxu0
    %2142 = vdwg.mxu0
    %v2144 = vsel %vm2066, %v2050, 0
    %v2146 = vsel %vm2070, %v1691, 0
    %2148 = vmatprep.subr.mxu0 0.0
    %2149 = vmatpush1.msra.mxu0 %v1684
    %2150 = vmatprep.subr.mxu0 0.0
    %2151 = vmatpush1.msra.mxu0 %v2146
    %2152 = vmatprep.subr.mxu0 0.0
    %2153 = vmatpush1.msra.mxu0 0.0
    %2154 = vmatprep.subr.mxu0 0.0
    %2155 = vmatpush1.msra.mxu0 0.0
    %2156 = vmatprep.subr.mxu0 0.0
    %2157 = vmatpush1.msra.mxu0 0.0
    %2158 = vmatprep.subr.mxu0 0.0
    %2159 = vmatpush1.msra.mxu0 0.0
    %2160 = vmatprep.subr.mxu0 0.0
    %2161 = vmatpush1.msra.mxu0 0.0
    %2162 = vmatprep.subr.mxu0 0.0
    %2163 = vmatpush1.msra.mxu0 0.0
    %2164 = vmatprep.subr.mxu0 0.0
    %2165 = vmatpush1.msra.mxu0 0.0
    %2166 = vmatprep.subr.mxu0 0.0
    %2167 = vmatpush1.msra.mxu0 0.0
    %2168 = vmatprep.subr.mxu0 0.0
    %2169 = vmatpush1.msra.mxu0 0.0
    %2170 = vmatprep.subr.mxu0 0.0
    %2171 = vmatpush1.msra.mxu0 0.0
    %2172 = vmatprep.subr.mxu0 0.0
    %2173 = vmatpush1.msra.mxu0 0.0
    %2174 = vmatprep.subr.mxu0 0.0
    %2175 = vmatpush1.msra.mxu0 0.0
    %2176 = vmatprep.subr.mxu0 0.0
    %2177 = vmatpush1.msra.mxu0 0.0
    %2178 = vmatprep.subr.mxu0 0.0
    %2179 = vmatpush1.msra.mxu0 0.0
    %2180 = vmatprep.subr.mxu0 0.0
    %2181 = vmatpush1.msra.mxu0 0.0
    %2182 = vmatprep.subr.mxu0 0.0
    %2183 = vmatpush1.msra.mxu0 0.0
    %2184 = vmatprep.subr.mxu0 0.0
    %2185 = vmatpush1.msra.mxu0 0.0
    %2186 = vmatprep.subr.mxu0 0.0
    %2187 = vmatpush1.msra.mxu0 0.0
    %2188 = vmatprep.subr.mxu0 0.0
    %2189 = vmatpush1.msra.mxu0 0.0
    %2190 = vmatprep.subr.mxu0 0.0
    %2191 = vmatpush1.msra.mxu0 0.0
    %2192 = vmatprep.subr.mxu0 0.0
    %2193 = vmatpush1.msra.mxu0 0.0
    %2194 = vmatprep.subr.mxu0 0.0
    %2195 = vmatpush1.msra.mxu0 0.0
    %2196 = vmatprep.subr.mxu0 0.0
    %2197 = vmatpush1.msra.mxu0 0.0
    %2198 = vmatprep.subr.mxu0 0.0
    %2199 = vmatpush1.msra.mxu0 0.0
    %2200 = vmatprep.subr.mxu0 0.0
    %2201 = vmatpush1.msra.mxu0 0.0
    %2202 = vmatprep.subr.mxu0 0.0
    %2203 = vmatpush1.msra.mxu0 0.0
    %2204 = vmatprep.subr.mxu0 0.0
    %2205 = vmatpush1.msra.mxu0 0.0
    %2206 = vmatprep.subr.mxu0 0.0
    %2207 = vmatpush1.msra.mxu0 0.0
    %2208 = vmatprep.subr.mxu0 0.0
    %2209 = vmatpush1.msra.mxu0 0.0
    %2210 = vmatprep.subr.mxu0 0.0
    %2211 = vmatpush1.msra.mxu0 0.0
    %2212 = vmatprep.mubr.f32.mxu0 0.0
    %2213 = vmatmul.mubr.f32.gmra.mrb[0].mxu0 %v2144
    %v2214 = vpop.f32.mrb[0].mxu0
    %v2215 = vadd.f32 0.0, %v2214
    %v2216 = vpop.f32.mrb[0].mxu0
    %2217 = vdwg.mxu0
    %v2218 = vmul.f32 %v2140, 0.1
    %v2219 = vmul.f32 %v2215, 0.1
    %v2222 = vrot.slane %v2219, 7
    %v2223 = vsel %vm903, %v2222, %v2218
    %vm2225 = vcmask 58368
    %2226 = vst.msk [vmem:[#allocation2] sm:$0x3] %vm2225, %v2223
    // Predicated region
    $region30: #{tpu_custom_call.1} parent=1 // pred_check
      _
    $region31: #{tpu_custom_call.1} parent=1 // pred_check_branch
      %2228 = sbr.rel (0) target = $region33
    $region32: #{tpu_custom_call.1} parent=1 // pred_region
      %s2230 = ssub.s32 32, 32
      %2231 = vsyncadd [#allocation3], %s2230
      %s2233 = sshll.u32 [#allocation2], 4
      %s2234 = int_to_ptr.vmem [resolvable:$true] %s2233
      %2236 = dma.vmem_to_hbm [thread:$0]  %s2234, 32, %s7, [#allocation3]
    $region33: #{tpu_custom_call.1} parent=1 // pred_fallthru
      _
    // Predicated region
    $region34: #{tpu_custom_call.1} parent=1 // pred_check
      _
    $region35: #{tpu_custom_call.1} parent=1 // pred_check_branch
      %2238 = sbr.rel (0) target = $region37
    $region36: #{tpu_custom_call.1} parent=1 // pred_region
      %2239 = dma.done [#allocation3], 32
    $region37: #{tpu_custom_call.1} parent=1 // pred_fallthru
      _
    %2240 = vsyncpa [#allocation3], 1

</llo_original>
